<compile_context>
chip_gen: v5e
topology: v5e:2x2
jax: 0.10.0
libtpu: 0.0.40
codegen_flags: <defaults>
</compile_context>

<pallas_src>
import functools
from typing import NamedTuple, Optional

import jax
import jax.numpy as jnp
from jax import lax
from jax.experimental import pallas as pl
from jax.experimental.pallas import tpu as pltpu

EPS = 1e-5


class RayBundle(NamedTuple):
    origins: jnp.ndarray     # (B, R, 3)
    directions: jnp.ndarray  # (B, R, 3)
    lengths: jnp.ndarray     # (B, R, n_pts)
    xys: jnp.ndarray         # (B, R, 2)


def _raysampler_kernel(z_ref, w_ref, u_ref, out_ref, *, n_coarse, n_fine,
                       add_input_samples):
    P = n_coarse              # coarse points per ray (sublane axis of z/w)
    S = n_fine                # fine samples per ray (sublane axis of u)
    Mw = P - 2                # interior weights: ray_weights[1:-1]
    Mc = P - 1                # len(cdf) == len(bins)
    L = z_ref.shape[-1]       # rays in this tile (lane axis)
    f32 = jnp.float32

    z = z_ref[...]            # (P, L), non-decreasing along axis 0 (NeRF contract)
    w = w_ref[...]            # (P, L)
    u = u_ref[...]            # (S, L), non-decreasing along axis 0

    # ---- bins: midpoints of consecutive coarse depths -----------------------
    bins = 0.5 * (z[1:, :] + z[:-1, :])                        # (Mc, L)

    # ---- pdf over interior weights ------------------------------------------
    wmid = w[1:-1, :] + EPS                                    # (Mw, L)
    pdf = wmid / jnp.sum(wmid, axis=0, keepdims=True)          # (Mw, L)

    # ---- exclusive prefix sum via a Hillis-Steele log scan (O(log P) adds) ---
    # (replaces the old (TR, Mc, Mw) masked-reduce; no big 3-D temp, exact f32)
    csum = pdf
    shift = 1
    while shift < Mw:
        prev = jnp.concatenate(
            [jnp.zeros((shift, L), f32), csum[:-shift, :]], axis=0)
        csum = csum + prev
        shift *= 2
    cdf = jnp.concatenate([jnp.zeros((1, L), f32), csum], axis=0)   # (Mc, L)
    # monotonicity guard (ulp-level; different summation trees per row)
    shift = 1
    while shift < Mc:
        prev = jnp.concatenate(
            [jnp.zeros((shift, L), f32), cdf[:-shift, :]], axis=0)
        cdf = jnp.maximum(cdf, prev)
        shift *= 2

    # ---- inverse-CDF sampling -------------------------------------------------
    # searchsorted(cdf, u, right=True) + gather, expressed as masked max/min
    # reductions over the points axis (reduce over the *leading* axis -> plain
    # vector max/min, no one-hot masks, no integer searchsorted reduce).
    cdf_e = cdf[:, None, :]                                    # (Mc, 1, L)
    bins_e = bins[:, None, :]
    le = cdf_e <= u[None, :, :]                                # (Mc, S, L)
    big = f32(3.0e38)
    cdf_g0 = jnp.max(jnp.where(le, cdf_e, f32(0.0)), axis=0)   # cdf[below]  (S, L)
    bins_g0 = jnp.max(jnp.where(le, bins_e, -big), axis=0)     # bins[below]
    cdf_g1 = jnp.min(jnp.where(le, big, cdf_e), axis=0)        # cdf[above]
    bins_g1 = jnp.min(jnp.where(le, big, bins_e), axis=0)      # bins[above]
    # u >= cdf[-1]  ->  reference clips above to the last index (== below)
    is_full = cdf[Mc - 1:Mc, :] <= u                           # (S, L)
    cdf_g1 = jnp.where(is_full, cdf_g0, cdf_g1)
    bins_g1 = jnp.where(is_full, bins_g0, bins_g1)

    denom = cdf_g1 - cdf_g0
    denom = jnp.where(denom < EPS, f32(1.0), denom)
    t = (u - cdf_g0) / denom
    samples = bins_g0 + t * (bins_g1 - bins_g0)                # (S, L), sorted

    if not add_input_samples:
        # samples are already sorted along axis 0 -> no sort needed.
        out_ref[...] = samples.astype(out_ref.dtype)
        return

    # ---- merge two sorted sequences (z and samples) by rank -------------------
    # rank of z[i]       = i + #{j : samples[j] <  z[i]}
    # rank of samples[j] = j + #{i : z[i]      <= samples[j]}
    # (z placed before equal samples -> ranks are a permutation of 0..T-1)
    T = P + S
    cnt_z = jnp.sum((samples[:, None, :] < z[None, :, :]).astype(jnp.int32),
                    axis=0)                                    # (P, L)
    cnt_s = jnp.sum((z[:, None, :] <= samples[None, :, :]).astype(jnp.int32),
                    axis=0)                                    # (S, L)
    rank_z = lax.broadcasted_iota(jnp.int32, (P, L), 0) + cnt_z
    rank_s = lax.broadcasted_iota(jnp.int32, (S, L), 0) + cnt_s

    # scatter by rank (reduce over the leading axis -> plain vector adds)
    k_iota = lax.broadcasted_iota(jnp.int32, (1, T, 1), 1)
    out_z = jnp.sum(
        jnp.where(rank_z[:, None, :] == k_iota, z[:, None, :], f32(0.0)),
        axis=0)                                                # (T, L)
    out_s = jnp.sum(
        jnp.where(rank_s[:, None, :] == k_iota, samples[:, None, :], f32(0.0)),
        axis=0)                                                # (T, L)
    out_ref[...] = (out_z + out_s).astype(out_ref.dtype)


def _choose_lane_tile(n_rays, P, S, T):
    """Pick the ray-tile width (lanes) from a rough VMEM budget of the temps."""
    per_lane = 4 * (max(P, S) * T + 2 * (P - 1) * S + 6 * T + 4 * (P + S))
    budget = 16 * 1024 * 1024
    lanes = (budget // max(per_lane, 1)) // 128 * 128
    lanes = max(128, min(1024, lanes))
    # do not tile wider than the (padded) number of rays
    lanes = min(lanes, max(128, ((n_rays + 127) // 128) * 128))
    return int(lanes)


@functools.partial(jax.jit, static_argnames=("n_fine", "add_input_samples"))
def _importance_sample_and_sort(z_flat, w_flat, u, n_fine, add_input_samples):
    N, P = z_flat.shape
    S = n_fine
    T = P + S if add_input_samples else S

    L = _choose_lane_tile(N, P, S, T)
    n_pad = (-N) % L
    if n_pad:
        # pad with copies of the last (valid) ray; results are sliced off below
        z_flat = jnp.pad(z_flat, ((0, n_pad), (0, 0)), mode="edge")
        w_flat = jnp.pad(w_flat, ((0, n_pad), (0, 0)), mode="edge")
        u = jnp.pad(u, ((0, n_pad), (0, 0)), mode="edge")
    N_pad = N + n_pad

    # rays-on-lanes layout
    z_t = z_flat.T            # (P, N_pad)
    w_t = w_flat.T            # (P, N_pad)
    u_t = u.T                 # (S, N_pad)

    kernel = functools.partial(_raysampler_kernel, n_coarse=P, n_fine=S,
                               add_input_samples=add_input_samples)
    out_t = pl.pallas_call(
        kernel,
        out_shape=jax.ShapeDtypeStruct((T, N_pad), jnp.float32),
        grid_spec=pltpu.PrefetchScalarGridSpec(
            num_scalar_prefetch=0,
            grid=(N_pad // L,),
            in_specs=[
                pl.BlockSpec((P, L), lambda i: (0, i)),
                pl.BlockSpec((P, L), lambda i: (0, i)),
                pl.BlockSpec((S, L), lambda i: (0, i)),
            ],
            out_specs=pl.BlockSpec((T, L), lambda i: (0, i)),
        ),
        compiler_params=pltpu.CompilerParams(
            dimension_semantics=("parallel",),
            vmem_limit_bytes=48 * 1024 * 1024),
    )(z_t, w_t, u_t)

    return out_t.T[:N]        # (N, T)


class ProbabilisticRaysampler:
    """JAX/Pallas port of projects/nerf ProbabilisticRaysampler (forward only)."""

    def __init__(self, n_pts_per_ray: int, stratified: bool,
                 stratified_test: bool, add_input_samples: bool = True):
        self._n_pts_per_ray = n_pts_per_ray
        self._stratified = stratified
        self._stratified_test = stratified_test
        self._add_input_samples = add_input_samples
        self.training = False  # eval mode by default

    def __call__(self, input_ray_bundle: RayBundle, ray_weights: jnp.ndarray,
                 rng_key: Optional[jax.Array] = None) -> RayBundle:
        z_vals = input_ray_bundle.lengths
        B, R, P = z_vals.shape
        N = B * R
        S = self._n_pts_per_ray

        det = not ((self._stratified and self.training)
                   or (self._stratified_test and (not self.training)))
        if det:
            u = jnp.broadcast_to(
                jnp.linspace(0.0, 1.0, S, dtype=jnp.float32), (N, S))
        else:
            # stochastic `u` (torch.rand equivalent) in plain-JAX glue; sorting
            # it per ray leaves the final sorted lengths unchanged and lets the
            # kernel merge two already-sorted sequences instead of sorting.
            if rng_key is None:
                rng_key = jax.random.PRNGKey(0)
            u = jax.random.uniform(rng_key, (N, S), dtype=jnp.float32)
            u = jnp.sort(u, axis=-1)

        z_flat = z_vals.reshape(N, P).astype(jnp.float32)
        w_flat = ray_weights.reshape(N, P).astype(jnp.float32)

        sorted_lengths = _importance_sample_and_sort(
            z_flat, w_flat, u, S, self._add_input_samples)
        lengths = sorted_lengths.reshape(B, R, -1)

        return RayBundle(origins=input_ray_bundle.origins,
                         directions=input_ray_bundle.directions,
                         lengths=lengths,
                         xys=input_ray_bundle.xys)


# ----------------------------- pure-JAX reference -----------------------------
def _sample_pdf_ref(bins, weights, u):
    w = weights + EPS
    pdf = w / jnp.sum(w, axis=-1, keepdims=True)
    cdf = jnp.cumsum(pdf, axis=-1)
    cdf = jnp.concatenate([jnp.zeros_like(cdf[..., :1]), cdf], axis=-1)
    inds = jax.vmap(lambda c, uu: jnp.searchsorted(c, uu, side="right"))(cdf, u)
    below = jnp.clip(inds - 1, 0, None)
    above = jnp.clip(inds, None, cdf.shape[-1] - 1)
    cdf_g0 = jnp.take_along_axis(cdf, below, axis=-1)
    cdf_g1 = jnp.take_along_axis(cdf, above, axis=-1)
    bins_g0 = jnp.take_along_axis(bins, below, axis=-1)
    bins_g1 = jnp.take_along_axis(bins, above, axis=-1)
    denom = cdf_g1 - cdf_g0
    denom = jnp.where(denom < EPS, jnp.ones_like(denom), denom)
    t = (u - cdf_g0) / denom
    return bins_g0 + t * (bins_g1 - bins_g0)


def _reference_forward(lengths, ray_weights, n_fine, add_input_samples):
    B, R, P = lengths.shape
    z = lengths.reshape(-1, P).astype(jnp.float32)
    w = ray_weights.reshape(-1, P).astype(jnp.float32)
    bins = 0.5 * (z[:, 1:] + z[:, :-1])
    u = jnp.broadcast_to(jnp.linspace(0.0, 1.0, n_fine, dtype=jnp.float32),
                         (z.shape[0], n_fine))
    samples = _sample_pdf_ref(bins, w[:, 1:-1], u)
    vals = jnp.concatenate([z, samples], axis=-1) if add_input_samples else samples
    return jnp.sort(vals, axis=-1).reshape(B, R, -1)


if __name__ == "__main__":
    key = jax.random.PRNGKey(0)
    B, R, P, S = 2, 64, 16, 16  # batch, rays/image, coarse pts/ray, fine pts/ray
    k1, k2, k3, k4, k5, k6 = jax.random.split(key, 6)

    origins = jax.random.normal(k1, (B, R, 3), jnp.float32)
    directions = jax.random.normal(k2, (B, R, 3), jnp.float32)
    xys = jax.random.uniform(k3, (B, R, 2), jnp.float32, minval=-1.0, maxval=1.0)
    base = jnp.linspace(2.0, 6.0, P, dtype=jnp.float32)
    jitter = jax.random.uniform(k4, (B, R, P), jnp.float32, 0.0, 0.1)
    lengths = jnp.sort(base[None, None, :] + jitter, axis=-1)       # sorted coarse depths
    ray_weights = jax.random.uniform(k5, (B, R, P), jnp.float32, 0.0, 1.0)

    bundle = RayBundle(origins=origins, directions=directions,
                       lengths=lengths, xys=xys)

    # deterministic path, add_input_samples=True
    sampler = ProbabilisticRaysampler(n_pts_per_ray=S, stratified=False,
                                      stratified_test=False,
                                      add_input_samples=True)
    out = sampler(bundle, ray_weights)
    jax.block_until_ready(out.lengths)
    ref = _reference_forward(lengths, ray_weights, S, add_input_samples=True)
    assert out.lengths.shape == (B, R, P + S), out.lengths.shape
    assert bool(jnp.all(jnp.isfinite(out.lengths)))
    assert bool(jnp.all(jnp.diff(out.lengths, axis=-1) >= 0.0))      # sorted
    assert bool(jnp.allclose(out.lengths, ref, atol=1e-3, rtol=1e-4))

    # deterministic path, add_input_samples=False
    sampler_ns = ProbabilisticRaysampler(n_pts_per_ray=S, stratified=False,
                                         stratified_test=False,
                                         add_input_samples=False)
    out_ns = sampler_ns(bundle, ray_weights)
    jax.block_until_ready(out_ns.lengths)
    ref_ns = _reference_forward(lengths, ray_weights, S, add_input_samples=False)
    assert out_ns.lengths.shape == (B, R, S)
    assert bool(jnp.allclose(out_ns.lengths, ref_ns, atol=1e-3, rtol=1e-4))

    # stochastic path (stratified_test=True in eval mode): sanity checks only
    sampler_st = ProbabilisticRaysampler(n_pts_per_ray=S, stratified=False,
                                         stratified_test=True,
                                         add_input_samples=True)
    out_st = sampler_st(bundle, ray_weights, rng_key=k6)
    jax.block_until_ready(out_st.lengths)
    assert out_st.lengths.shape == (B, R, P + S)
    assert bool(jnp.all(jnp.isfinite(out_st.lengths)))
    assert bool(jnp.all(jnp.diff(out_st.lengths, axis=-1) >= 0.0))

    print("KERNEL_OK")
</pallas_src>

<mosaic_0001>
module attributes {stable_mosaic.version = 11 : i64} {
  func.func @_raysampler_kernel(%arg0: i32, %arg1: memref<16x128xf32, #tpu.memory_space<vmem>>, %arg2: memref<16x128xf32, #tpu.memory_space<vmem>>, %arg3: memref<16x128xf32, #tpu.memory_space<vmem>>, %arg4: memref<32x128xf32, #tpu.memory_space<vmem>>) attributes {dimension_semantics = [#tpu.dimension_semantics<parallel>], iteration_bounds = array<i64: 1>, scalar_prefetch = 0 : i64, scratch_operands = 0 : i64, tpu.core_type = #tpu.core_type<tc>, window_params = [{transform_indices = @transform_0, window_bounds = array<i64: 16, 128>}, {transform_indices = @transform_1, window_bounds = array<i64: 16, 128>}, {transform_indices = @transform_2, window_bounds = array<i64: 16, 128>}, {transform_indices = @transform_3, window_bounds = array<i64: 32, 128>}]} {
    %c0 = arith.constant 0 : index
    %c0_0 = arith.constant 0 : index
    %0 = vector.load %arg1[%c0, %c0_0] : memref<16x128xf32, #tpu.memory_space<vmem>>, vector<16x128xf32>
    %c0_1 = arith.constant 0 : index
    %c0_2 = arith.constant 0 : index
    %1 = vector.load %arg2[%c0_1, %c0_2] : memref<16x128xf32, #tpu.memory_space<vmem>>, vector<16x128xf32>
    %c0_3 = arith.constant 0 : index
    %c0_4 = arith.constant 0 : index
    %2 = vector.load %arg3[%c0_3, %c0_4] : memref<16x128xf32, #tpu.memory_space<vmem>>, vector<16x128xf32>
    %3 = vector.extract_strided_slice %0 {offsets = [1, 0], sizes = [15, 128], strides = [1, 1]} : vector<16x128xf32> to vector<15x128xf32>
    %4 = vector.extract_strided_slice %0 {offsets = [0, 0], sizes = [15, 128], strides = [1, 1]} : vector<16x128xf32> to vector<15x128xf32>
    %5 = arith.addf %3, %4 : vector<15x128xf32>
    %cst = arith.constant 5.000000e-01 : f32
    %6 = vector.broadcast %cst : f32 to vector<15x128xf32>
    %7 = arith.mulf %6, %5 : vector<15x128xf32>
    %8 = vector.extract_strided_slice %1 {offsets = [1, 0], sizes = [14, 128], strides = [1, 1]} : vector<16x128xf32> to vector<14x128xf32>
    %cst_5 = arith.constant 9.99999974E-6 : f32
    %9 = vector.broadcast %cst_5 : f32 to vector<14x128xf32>
    %10 = arith.addf %8, %9 : vector<14x128xf32>
    %cst_6 = arith.constant dense<0.000000e+00> : vector<128xf32>
    %11 = vector.multi_reduction <add>, %10, %cst_6 [0] : vector<14x128xf32> to vector<128xf32>
    %12 = vector.shape_cast %11 : vector<128xf32> to vector<1x128xf32>
    %13 = vector.broadcast %12 : vector<1x128xf32> to vector<14x128xf32>
    %14 = arith.divf %10, %13 : vector<14x128xf32>
    %cst_7 = arith.constant 0.000000e+00 : f32
    %15 = vector.broadcast %cst_7 : f32 to vector<1x128xf32>
    %16 = vector.extract_strided_slice %14 {offsets = [0, 0], sizes = [13, 128], strides = [1, 1]} : vector<14x128xf32> to vector<13x128xf32>
    %17 = tpu.concatenate %15, %16 in 0 : vector<1x128xf32>, vector<13x128xf32> -> vector<14x128xf32>
    %18 = arith.addf %14, %17 : vector<14x128xf32>
    %cst_8 = arith.constant 0.000000e+00 : f32
    %19 = vector.broadcast %cst_8 : f32 to vector<2x128xf32>
    %20 = vector.extract_strided_slice %18 {offsets = [0, 0], sizes = [12, 128], strides = [1, 1]} : vector<14x128xf32> to vector<12x128xf32>
    %21 = tpu.concatenate %19, %20 in 0 : vector<2x128xf32>, vector<12x128xf32> -> vector<14x128xf32>
    %22 = arith.addf %18, %21 : vector<14x128xf32>
    %cst_9 = arith.constant 0.000000e+00 : f32
    %23 = vector.broadcast %cst_9 : f32 to vector<4x128xf32>
    %24 = vector.extract_strided_slice %22 {offsets = [0, 0], sizes = [10, 128], strides = [1, 1]} : vector<14x128xf32> to vector<10x128xf32>
    %25 = tpu.concatenate %23, %24 in 0 : vector<4x128xf32>, vector<10x128xf32> -> vector<14x128xf32>
    %26 = arith.addf %22, %25 : vector<14x128xf32>
    %cst_10 = arith.constant 0.000000e+00 : f32
    %27 = vector.broadcast %cst_10 : f32 to vector<8x128xf32>
    %28 = vector.extract_strided_slice %26 {offsets = [0, 0], sizes = [6, 128], strides = [1, 1]} : vector<14x128xf32> to vector<6x128xf32>
    %29 = tpu.concatenate %27, %28 in 0 : vector<8x128xf32>, vector<6x128xf32> -> vector<14x128xf32>
    %30 = arith.addf %26, %29 : vector<14x128xf32>
    %cst_11 = arith.constant 0.000000e+00 : f32
    %31 = vector.broadcast %cst_11 : f32 to vector<1x128xf32>
    %32 = tpu.concatenate %31, %30 in 0 : vector<1x128xf32>, vector<14x128xf32> -> vector<15x128xf32>
    %cst_12 = arith.constant 0.000000e+00 : f32
    %33 = vector.broadcast %cst_12 : f32 to vector<1x128xf32>
    %34 = vector.extract_strided_slice %32 {offsets = [0, 0], sizes = [14, 128], strides = [1, 1]} : vector<15x128xf32> to vector<14x128xf32>
    %35 = tpu.concatenate %33, %34 in 0 : vector<1x128xf32>, vector<14x128xf32> -> vector<15x128xf32>
    %36 = arith.maximumf %32, %35 : vector<15x128xf32>
    %cst_13 = arith.constant 0.000000e+00 : f32
    %37 = vector.broadcast %cst_13 : f32 to vector<2x128xf32>
    %38 = vector.extract_strided_slice %36 {offsets = [0, 0], sizes = [13, 128], strides = [1, 1]} : vector<15x128xf32> to vector<13x128xf32>
    %39 = tpu.concatenate %37, %38 in 0 : vector<2x128xf32>, vector<13x128xf32> -> vector<15x128xf32>
    %40 = arith.maximumf %36, %39 : vector<15x128xf32>
    %cst_14 = arith.constant 0.000000e+00 : f32
    %41 = vector.broadcast %cst_14 : f32 to vector<4x128xf32>
    %42 = vector.extract_strided_slice %40 {offsets = [0, 0], sizes = [11, 128], strides = [1, 1]} : vector<15x128xf32> to vector<11x128xf32>
    %43 = tpu.concatenate %41, %42 in 0 : vector<4x128xf32>, vector<11x128xf32> -> vector<15x128xf32>
    %44 = arith.maximumf %40, %43 : vector<15x128xf32>
    %cst_15 = arith.constant 0.000000e+00 : f32
    %45 = vector.broadcast %cst_15 : f32 to vector<8x128xf32>
    %46 = vector.extract_strided_slice %44 {offsets = [0, 0], sizes = [7, 128], strides = [1, 1]} : vector<15x128xf32> to vector<7x128xf32>
    %47 = tpu.concatenate %45, %46 in 0 : vector<8x128xf32>, vector<7x128xf32> -> vector<15x128xf32>
    %48 = arith.maximumf %44, %47 : vector<15x128xf32>
    %49 = vector.shape_cast %48 : vector<15x128xf32> to vector<15x1x128xf32>
    %50 = vector.shape_cast %7 : vector<15x128xf32> to vector<15x1x128xf32>
    %51 = vector.shape_cast %2 : vector<16x128xf32> to vector<1x16x128xf32>
    %52 = vector.broadcast %49 : vector<15x1x128xf32> to vector<15x16x128xf32>
    %53 = vector.broadcast %51 : vector<1x16x128xf32> to vector<15x16x128xf32>
    %54 = arith.cmpf ole, %52, %53 : vector<15x16x128xf32>
    %cst_16 = arith.constant 0.000000e+00 : f32
    %55 = vector.shape_cast %49 : vector<15x1x128xf32> to vector<15x1x128xf32>
    %56 = vector.broadcast %55 : vector<15x1x128xf32> to vector<15x16x128xf32>
    %57 = vector.broadcast %cst_16 : f32 to vector<15x16x128xf32>
    %58 = arith.select %54, %56, %57 : vector<15x16x128xi1>, vector<15x16x128xf32>
    %cst_17 = arith.constant dense<0xFF800000> : vector<16x128xf32>
    %59 = vector.multi_reduction <maximumf>, %58, %cst_17 [0] : vector<15x16x128xf32> to vector<16x128xf32>
    %cst_18 = arith.constant 0.000000e+00 : f32
    %cst_19 = arith.constant 3.000000e+38 : f32
    %60 = arith.subf %cst_18, %cst_19 : f32
    %61 = vector.shape_cast %50 : vector<15x1x128xf32> to vector<15x1x128xf32>
    %62 = vector.broadcast %61 : vector<15x1x128xf32> to vector<15x16x128xf32>
    %63 = vector.broadcast %60 : f32 to vector<15x16x128xf32>
    %64 = arith.select %54, %62, %63 : vector<15x16x128xi1>, vector<15x16x128xf32>
    %cst_20 = arith.constant dense<0xFF800000> : vector<16x128xf32>
    %65 = vector.multi_reduction <maximumf>, %64, %cst_20 [0] : vector<15x16x128xf32> to vector<16x128xf32>
    %cst_21 = arith.constant 3.000000e+38 : f32
    %66 = vector.broadcast %cst_21 : f32 to vector<15x16x128xf32>
    %67 = vector.shape_cast %49 : vector<15x1x128xf32> to vector<15x1x128xf32>
    %68 = vector.broadcast %67 : vector<15x1x128xf32> to vector<15x16x128xf32>
    %69 = arith.select %54, %66, %68 : vector<15x16x128xi1>, vector<15x16x128xf32>
    %cst_22 = arith.constant dense<0x7F800000> : vector<16x128xf32>
    %70 = vector.multi_reduction <minimumf>, %69, %cst_22 [0] : vector<15x16x128xf32> to vector<16x128xf32>
    %cst_23 = arith.constant 3.000000e+38 : f32
    %71 = vector.broadcast %cst_23 : f32 to vector<15x16x128xf32>
    %72 = vector.shape_cast %50 : vector<15x1x128xf32> to vector<15x1x128xf32>
    %73 = vector.broadcast %72 : vector<15x1x128xf32> to vector<15x16x128xf32>
    %74 = arith.select %54, %71, %73 : vector<15x16x128xi1>, vector<15x16x128xf32>
    %cst_24 = arith.constant dense<0x7F800000> : vector<16x128xf32>
    %75 = vector.multi_reduction <minimumf>, %74, %cst_24 [0] : vector<15x16x128xf32> to vector<16x128xf32>
    %76 = vector.extract_strided_slice %48 {offsets = [14, 0], sizes = [1, 128], strides = [1, 1]} : vector<15x128xf32> to vector<1x128xf32>
    %77 = vector.broadcast %76 : vector<1x128xf32> to vector<16x128xf32>
    %78 = arith.cmpf ole, %77, %2 : vector<16x128xf32>
    %79 = arith.select %78, %59, %70 : vector<16x128xi1>, vector<16x128xf32>
    %80 = arith.select %78, %65, %75 : vector<16x128xi1>, vector<16x128xf32>
    %81 = arith.subf %79, %59 : vector<16x128xf32>
    %cst_25 = arith.constant 9.99999974E-6 : f32
    %82 = vector.broadcast %cst_25 : f32 to vector<16x128xf32>
    %83 = arith.cmpf olt, %81, %82 : vector<16x128xf32>
    %cst_26 = arith.constant 1.000000e+00 : f32
    %84 = vector.broadcast %cst_26 : f32 to vector<16x128xf32>
    %85 = arith.select %83, %84, %81 : vector<16x128xi1>, vector<16x128xf32>
    %86 = arith.subf %2, %59 : vector<16x128xf32>
    %87 = arith.divf %86, %85 : vector<16x128xf32>
    %88 = arith.subf %80, %65 : vector<16x128xf32>
    %89 = arith.mulf %87, %88 : vector<16x128xf32>
    %90 = arith.addf %65, %89 : vector<16x128xf32>
    %91 = vector.shape_cast %90 : vector<16x128xf32> to vector<16x1x128xf32>
    %92 = vector.shape_cast %0 : vector<16x128xf32> to vector<1x16x128xf32>
    %93 = vector.broadcast %91 : vector<16x1x128xf32> to vector<16x16x128xf32>
    %94 = vector.broadcast %92 : vector<1x16x128xf32> to vector<16x16x128xf32>
    %95 = arith.cmpf olt, %93, %94 : vector<16x16x128xf32>
    %96 = arith.extui %95 : vector<16x16x128xi1> to vector<16x16x128xi32>
    %cst_27 = arith.constant dense<0> : vector<16x128xi32>
    %97 = vector.multi_reduction <add>, %96, %cst_27 [0] : vector<16x16x128xi32> to vector<16x128xi32>
    %98 = vector.shape_cast %0 : vector<16x128xf32> to vector<16x1x128xf32>
    %99 = vector.shape_cast %90 : vector<16x128xf32> to vector<1x16x128xf32>
    %100 = vector.broadcast %98 : vector<16x1x128xf32> to vector<16x16x128xf32>
    %101 = vector.broadcast %99 : vector<1x16x128xf32> to vector<16x16x128xf32>
    %102 = arith.cmpf ole, %100, %101 : vector<16x16x128xf32>
    %103 = arith.extui %102 : vector<16x16x128xi1> to vector<16x16x128xi32>
    %cst_28 = arith.constant dense<0> : vector<16x128xi32>
    %104 = vector.multi_reduction <add>, %103, %cst_28 [0] : vector<16x16x128xi32> to vector<16x128xi32>
    %105 = tpu.iota {dimensions = array<i32: 0>} : vector<16x128xi32>
    %106 = arith.addi %105, %97 : vector<16x128xi32>
    %107 = tpu.iota {dimensions = array<i32: 0>} : vector<16x128xi32>
    %108 = arith.addi %107, %104 : vector<16x128xi32>
    %109 = tpu.iota {dimensions = array<i32: 1>} : vector<1x32x1xi32>
    %110 = vector.shape_cast %106 : vector<16x128xi32> to vector<16x1x128xi32>
    %111 = vector.broadcast %110 : vector<16x1x128xi32> to vector<16x32x128xi32>
    %112 = vector.broadcast %109 : vector<1x32x1xi32> to vector<16x32x128xi32>
    %113 = arith.cmpi eq, %111, %112 : vector<16x32x128xi32>
    %114 = vector.shape_cast %0 : vector<16x128xf32> to vector<16x1x128xf32>
    %cst_29 = arith.constant 0.000000e+00 : f32
    %115 = vector.shape_cast %114 : vector<16x1x128xf32> to vector<16x1x128xf32>
    %116 = vector.broadcast %115 : vector<16x1x128xf32> to vector<16x32x128xf32>
    %117 = vector.broadcast %cst_29 : f32 to vector<16x32x128xf32>
    %118 = arith.select %113, %116, %117 : vector<16x32x128xi1>, vector<16x32x128xf32>
    %cst_30 = arith.constant dense<0.000000e+00> : vector<32x128xf32>
    %119 = vector.multi_reduction <add>, %118, %cst_30 [0] : vector<16x32x128xf32> to vector<32x128xf32>
    %120 = vector.shape_cast %108 : vector<16x128xi32> to vector<16x1x128xi32>
    %121 = vector.broadcast %120 : vector<16x1x128xi32> to vector<16x32x128xi32>
    %122 = vector.broadcast %109 : vector<1x32x1xi32> to vector<16x32x128xi32>
    %123 = arith.cmpi eq, %121, %122 : vector<16x32x128xi32>
    %124 = vector.shape_cast %90 : vector<16x128xf32> to vector<16x1x128xf32>
    %cst_31 = arith.constant 0.000000e+00 : f32
    %125 = vector.shape_cast %124 : vector<16x1x128xf32> to vector<16x1x128xf32>
    %126 = vector.broadcast %125 : vector<16x1x128xf32> to vector<16x32x128xf32>
    %127 = vector.broadcast %cst_31 : f32 to vector<16x32x128xf32>
    %128 = arith.select %123, %126, %127 : vector<16x32x128xi1>, vector<16x32x128xf32>
    %cst_32 = arith.constant dense<0.000000e+00> : vector<32x128xf32>
    %129 = vector.multi_reduction <add>, %128, %cst_32 [0] : vector<16x32x128xf32> to vector<32x128xf32>
    %130 = arith.addf %119, %129 : vector<32x128xf32>
    %c0_33 = arith.constant 0 : index
    %c0_34 = arith.constant 0 : index
    %131 = vector.load %arg4[%c0_33, %c0_34] : memref<32x128xf32, #tpu.memory_space<vmem>>, vector<32x128xf32>
    tpu.vector_store %arg4[%c0_33, %c0_34], %130 {strides = array<i32>} : memref<32x128xf32, #tpu.memory_space<vmem>>, vector<32x128xf32>,
    return
  }
  func.func @transform_0(%arg0: i32) -> (i32, i32) {
    %c0_i32 = arith.constant 0 : i32
    %c0_i32_0 = arith.constant 0 : i32
    return %c0_i32, %arg0 : i32, i32
  }
  func.func @transform_1(%arg0: i32) -> (i32, i32) {
    %c0_i32 = arith.constant 0 : i32
    %c0_i32_0 = arith.constant 0 : i32
    return %c0_i32, %arg0 : i32, i32
  }
  func.func @transform_2(%arg0: i32) -> (i32, i32) {
    %c0_i32 = arith.constant 0 : i32
    %c0_i32_0 = arith.constant 0 : i32
    return %c0_i32, %arg0 : i32, i32
  }
  func.func @transform_3(%arg0: i32) -> (i32, i32) {
    %c0_i32 = arith.constant 0 : i32
    %c0_i32_0 = arith.constant 0 : i32
    return %c0_i32, %arg0 : i32, i32
  }
}

</mosaic_0001>

<llo_original>
// kernel: _importance_sample_and_sort.1
$region0: #{_importance_sample_and_sort.1}
  #allocation0 [shape = 'u32[]', space=smem, size = 0x4, offset = 0x4, fixed_abs, tag = 'smem constant byte address 0x4 - core index']
  #allocation1 [shape = 'u32[72,128]{1,0:T(1,128)}', space=vmem, size = 0x9000, scoped, tag = 'internal scratch']
  %s0 = inlined_call_operand.hbm [shape: f32[16,128], index: 0, kind: input, shape index: {}]
  %s1 = inlined_call_operand.hbm [shape: f32[16,128], index: 1, kind: input, shape index: {}]
  %s2 = inlined_call_operand.hbm [shape: f32[16,128], index: 2, kind: input, shape index: {}]
  %s3 = inlined_call_operand.hbm [shape: f32[32,128], index: 3, kind: output, shape index: {}]
  %s4 = sld [smem:[#allocation0]]
  $region34: #{_importance_sample_and_sort.1} parent=0
    _
  %s6 = ssub.s32 1, %s4
  %s7 = scalar_select 0, %s6, %s4
  $region1: #{_importance_sample_and_sort.1} parent=0
    #allocation2 [shape = 'u8[8192]{0}', space=vmem, size = 0x2000, scoped, tag = 'input window, operand 0, single buffered']
    #allocation3 [shape = 's32[1]{0}', space=sflag, size = 0x4, scoped, tag = 'scoped memory for _importance_sample_and_sort.1']
    #allocation4 [shape = 's32[1]{0}', space=sflag, size = 0x4, scoped, tag = 'scoped memory for _importance_sample_and_sort.1']
    #allocation5 [shape = 'u8[8192]{0}', space=vmem, size = 0x2000, scoped, tag = 'input window, operand 1, single buffered']
    #allocation6 [shape = 's32[1]{0}', space=sflag, size = 0x4, scoped, tag = 'scoped memory for _importance_sample_and_sort.1']
    #allocation7 [shape = 'u8[8192]{0}', space=vmem, size = 0x2000, scoped, tag = 'input window, operand 2, single buffered']
    #allocation8 [shape = 'u8[16384]{0}', space=vmem, size = 0x4000, scoped, tag = 'output window, operand 0, single buffered']
    %8 = vsyncpa [#allocation3], 0
    %9 = vsyncpa [#allocation6], 0
    %10 = vsyncpa [#allocation4], 0
    // Predicated region
    $region2: #{_importance_sample_and_sort.1} parent=1 // pred_check
      _
    $region3: #{_importance_sample_and_sort.1} parent=1 // pred_check_branch
      %12 = sbr.rel (0) target = $region5
    $region4: #{_importance_sample_and_sort.1} parent=1 // pred_region
      %14 = vsyncadd [#allocation3], 0
      %s15 = sshll.u32 %s0, 4
      %s16 = int_to_ptr.hbm [resolvable:$true] %s15
      %s17 = sshll.u32 [#allocation2], 4
      %s18 = int_to_ptr.vmem [resolvable:$true] %s17
      %23 = dma.hbm_to_vmem [thread:$0]  %s16, 256, %s18, [#allocation3], 128, 128, 8
    $region5: #{_importance_sample_and_sort.1} parent=1 // pred_fallthru
      _
    // Predicated region
    $region6: #{_importance_sample_and_sort.1} parent=1 // pred_check
      _
    $region7: #{_importance_sample_and_sort.1} parent=1 // pred_check_branch
      %25 = sbr.rel (0) target = $region9
    $region8: #{_importance_sample_and_sort.1} parent=1 // pred_region
      %27 = vsyncadd [#allocation6], 0
      %s28 = sshll.u32 %s1, 4
      %s29 = int_to_ptr.hbm [resolvable:$true] %s28
      %s30 = sshll.u32 [#allocation5], 4
      %s31 = int_to_ptr.vmem [resolvable:$true] %s30
      %36 = dma.hbm_to_vmem [thread:$0]  %s29, 256, %s31, [#allocation6], 128, 128, 8
    $region9: #{_importance_sample_and_sort.1} parent=1 // pred_fallthru
      _
    // Predicated region
    $region10: #{_importance_sample_and_sort.1} parent=1 // pred_check
      _
    $region11: #{_importance_sample_and_sort.1} parent=1 // pred_check_branch
      %38 = sbr.rel (0) target = $region13
    $region12: #{_importance_sample_and_sort.1} parent=1 // pred_region
      %40 = vsyncadd [#allocation6], 0
      %s41 = sshll.u32 %s2, 4
      %s42 = int_to_ptr.hbm [resolvable:$true] %s41
      %s43 = sshll.u32 [#allocation7], 4
      %s44 = int_to_ptr.vmem [resolvable:$true] %s43
      %49 = dma.hbm_to_vmem [thread:$0]  %s42, 256, %s44, [#allocation6], 128, 128, 8
    $region13: #{_importance_sample_and_sort.1} parent=1 // pred_fallthru
      _
    // Predicated region
    $region14: #{_importance_sample_and_sort.1} parent=1 // pred_check
      _
    $region15: #{_importance_sample_and_sort.1} parent=1 // pred_check_branch
      %51 = sbr.rel (0) target = $region17
    $region16: #{_importance_sample_and_sort.1} parent=1 // pred_region
      %53 = dma.done [#allocation3], 256
    $region17: #{_importance_sample_and_sort.1} parent=1 // pred_fallthru
      _
    // Predicated region
    $region18: #{_importance_sample_and_sort.1} parent=1 // pred_check
      _
    $region19: #{_importance_sample_and_sort.1} parent=1 // pred_check_branch
      %55 = sbr.rel (0) target = $region21
    $region20: #{_importance_sample_and_sort.1} parent=1 // pred_region
      %57 = dma.done [#allocation6], 256
    $region21: #{_importance_sample_and_sort.1} parent=1 // pred_fallthru
      _
    // Predicated region
    $region22: #{_importance_sample_and_sort.1} parent=1 // pred_check
      _
    $region23: #{_importance_sample_and_sort.1} parent=1 // pred_check_branch
      %59 = sbr.rel (0) target = $region25
    $region24: #{_importance_sample_and_sort.1} parent=1 // pred_region
      %61 = dma.done [#allocation6], 256
    $region25: #{_importance_sample_and_sort.1} parent=1 // pred_fallthru
      _
    %v62 = vld [vmem:[#allocation2] sm:$0xff]
    %v63 = vld [vmem:[#allocation2 + $0x8] sm:$0xff]
    %v64 = vld [vmem:[#allocation5] sm:$0xff]
    %v65 = vld [vmem:[#allocation5 + $0x8] sm:$0xff]
    %v66 = vld [vmem:[#allocation7] sm:$0xff]
    %v67 = vld [vmem:[#allocation7 + $0x8] sm:$0xff]
    %vm70 = vcmask 1040384
    %v71 = vrot.slane %v62, 7
    %v72 = vrot.slane %v63, 7
    %v73 = vsel %vm70, %v71, %v72
    %v76 = vadd.f32 %v62, %v71
    %v77 = vadd.f32 %v63, %v73
    %v78 = vmul.f32 %v76, 0.5
    %v79 = vmul.f32 %v77, 0.5
    %v80 = vadd.f32 %v64, 1e-05
    %v81 = vadd.f32 %v65, 1e-05
    %vm84 = vcmask 1046528
    %v85 = vrot.slane %v80, 1
    %v86 = vrot.slane %v81, 1
    %v87 = vsel %vm84, %v85, %v86
    %vm90 = vcmask 1045504
    %v91 = vsel %vm90, %v86, 0.0
    %v92 = vadd.f32 %v87, %v91
    %v93 = vrot.slane %v92, 4
    %v94 = vadd.f32 %v92, %v93
    %v95 = vrot.slane %v94, 2
    %v96 = vadd.f32 %v94, %v95
    %v97 = vrot.slane %v96, 1
    %v98 = vadd.f32 %v96, %v97
    %v99 = vrcp.pop %v98
    %v100 = vmul.f32 %v98, %v99
    %v101 = vsub.f32 1.0, %v100
    %v102 = vmul.f32 %v99, %v101
    %v103 = vadd.f32 %v99, %v102
    %vm104 = vweird.f32 %v98
    %vm105 = vweird.f32 %v99
    %vm106 = vmor %vm104, %vm105
    %v107 = vsel %vm106, %v99, %v103
    %v108 = vand.u32 2147483647, %v98
    %vm109 = vcmp.eq.f32.partialorder %v108, 8.507059e+37
    %v110 = vand.u32 %v98, 2147483648
    %v111 = vor.u32 1.1754944e-38, %v110
    %v112 = vsel %vm109, %v111, %v107
    %v113 = vmul.f32 %v80, %v112
    %v114 = vmul.f32 %v81, %v112
    %v115 = vsel %vm70, 0.0, %v113
    %v118 = vrot.slane %v115, 7
    %v119 = vrot.slane %v114, 7
    %v120 = vsel %vm70, %v118, %v119
    %v123 = vadd.f32 %v113, %v118
    %v124 = vadd.f32 %v114, %v120
    %v127 = vrot.slane %v123, 7
    %v128 = vrot.slane %v124, 7
    %v129 = vsel %vm70, %v127, %v128
    %vm131 = vcmask 1041408
    %v132 = vsel %vm131, 0.0, %v127
    %v134 = vrot.slane %v132, 7
    %v135 = vrot.slane %v129, 7
    %v136 = vsel %vm70, %v134, %v135
    %v139 = vadd.f32 %v123, %v134
    %v140 = vadd.f32 %v124, %v136
    %vm143 = vcmask 1042432
    %v144 = vrot.slane %v139, 5
    %v145 = vrot.slane %v140, 5
    %v146 = vsel %vm143, %v144, %v145
    %vm148 = vcmask 1043456
    %v149 = vsel %vm148, 0.0, %v144
    %v151 = vrot.slane %v149, 7
    %v152 = vrot.slane %v146, 7
    %v153 = vsel %vm70, %v151, %v152
    %v156 = vadd.f32 %v139, %v151
    %v157 = vadd.f32 %v140, %v153
    %v159 = vrot.slane %v156, 1
    %v161 = vrot.slane 0.0, 7
    %v162 = vrot.slane %v159, 7
    %v163 = vsel %vm70, %v161, %v162
    %v166 = vadd.f32 %v156, %v161
    %v167 = vadd.f32 %v157, %v163
    %v168 = vsel %vm70, 0.0, %v166
    %v171 = vrot.slane %v168, 7
    %v172 = vrot.slane %v167, 7
    %v173 = vsel %vm70, %v171, %v172
    %v176 = vsel %vm70, 0.0, %v171
    %v177 = vmax.f32 %v168, %v176
    %v178 = vmax.f32 %v167, %v173
    %v181 = vrot.slane %v177, 6
    %v182 = vrot.slane %v178, 6
    %v183 = vsel %vm131, %v181, %v182
    %v186 = vsel %vm131, 0.0, %v181
    %v187 = vmax.f32 %v177, %v186
    %v188 = vmax.f32 %v178, %v183
    %v191 = vrot.slane %v187, 4
    %v192 = vrot.slane %v188, 4
    %v193 = vsel %vm148, %v191, %v192
    %v196 = vsel %vm148, 0.0, %v191
    %v197 = vmax.f32 %v187, %v196
    %v198 = vmax.f32 %v188, %v193
    %v199 = vmax.f32 %v197, 0.0
    %v200 = vmax.f32 %v198, %v197
    %v203 = vrot.slane %v199, 1
    %v204 = vrot.slane %v199, 2
    %v205 = vrot.slane %v199, 3
    %v206 = vrot.slane %v199, 4
    %v207 = vrot.slane %v199, 5
    %v208 = vrot.slane %v199, 6
    %v209 = vrot.slane %v199, 7
    %v210 = vrot.slane %v200, 1
    %v211 = vrot.slane %v200, 2
    %v212 = vrot.slane %v200, 3
    %v213 = vrot.slane %v200, 4
    %v214 = vrot.slane %v200, 5
    %v215 = vrot.slane %v200, 6
    %218 = vst [vmem:[#allocation1] sm:$0xff] %v78
    %s219 = scalar_lea.vmem [#allocation1], 1
    %v220 = vld [vmem:[%s219] ss:$9 sm:$0xff]
    %s221 = scalar_lea.vmem [#allocation1], 2
    %v222 = vld [vmem:[%s221] ss:$9 sm:$0xff]
    %s223 = scalar_lea.vmem [#allocation1], 3
    %v224 = vld [vmem:[%s223] ss:$9 sm:$0xff]
    %s225 = scalar_lea.vmem [#allocation1], 4
    %v226 = vld [vmem:[%s225] ss:$9 sm:$0xff]
    %s227 = scalar_lea.vmem [#allocation1], 5
    %v228 = vld [vmem:[%s227] ss:$9 sm:$0xff]
    %s229 = scalar_lea.vmem [#allocation1], 6
    %v230 = vld [vmem:[%s229] ss:$9 sm:$0xff]
    %s231 = scalar_lea.vmem [#allocation1], 7
    %v232 = vld [vmem:[%s231] ss:$9 sm:$0xff]
    %233 = vst [vmem:[#allocation1] sm:$0xff] %v79
    %v234 = vld [vmem:[#allocation1] ss:$9 sm:$0xff]
    %v235 = vld [vmem:[%s219] ss:$9 sm:$0xff]
    %v236 = vld [vmem:[%s221] ss:$9 sm:$0xff]
    %v237 = vld [vmem:[%s223] ss:$9 sm:$0xff]
    %v238 = vld [vmem:[%s225] ss:$9 sm:$0xff]
    %v239 = vld [vmem:[%s227] ss:$9 sm:$0xff]
    %v240 = vld [vmem:[%s229] ss:$9 sm:$0xff]
    %v241 = vld [vmem:[%s231] ss:$9 sm:$0xff]
    %v242 = vperm.slane %v199, 0
    %v243 = vperm.slane %v203, 0
    %v244 = vperm.slane %v204, 0
    %v245 = vperm.slane %v205, 0
    %v246 = vperm.slane %v206, 0
    %v247 = vperm.slane %v207, 0
    %v248 = vperm.slane %v208, 0
    %v249 = vperm.slane %v209, 0
    %v250 = vperm.slane %v200, 0
    %v251 = vperm.slane %v210, 0
    %v252 = vperm.slane %v211, 0
    %v253 = vperm.slane %v212, 0
    %v254 = vperm.slane %v213, 0
    %v255 = vperm.slane %v214, 0
    %v256 = vperm.slane %v215, 0
    %vm272 = vcmp.le.f32.partialorder %v242, %v66
    %vm273 = vcmp.le.f32.partialorder %v242, %v67
    %vm274 = vcmp.le.f32.partialorder %v243, %v66
    %vm275 = vcmp.le.f32.partialorder %v243, %v67
    %vm276 = vcmp.le.f32.partialorder %v244, %v66
    %vm277 = vcmp.le.f32.partialorder %v244, %v67
    %vm278 = vcmp.le.f32.partialorder %v245, %v66
    %vm279 = vcmp.le.f32.partialorder %v245, %v67
    %vm280 = vcmp.le.f32.partialorder %v246, %v66
    %vm281 = vcmp.le.f32.partialorder %v246, %v67
    %vm282 = vcmp.le.f32.partialorder %v247, %v66
    %vm283 = vcmp.le.f32.partialorder %v247, %v67
    %vm284 = vcmp.le.f32.partialorder %v248, %v66
    %vm285 = vcmp.le.f32.partialorder %v248, %v67
    %vm286 = vcmp.le.f32.partialorder %v249, %v66
    %vm287 = vcmp.le.f32.partialorder %v249, %v67
    %vm288 = vcmp.le.f32.partialorder %v250, %v66
    %vm289 = vcmp.le.f32.partialorder %v250, %v67
    %vm290 = vcmp.le.f32.partialorder %v251, %v66
    %vm291 = vcmp.le.f32.partialorder %v251, %v67
    %vm292 = vcmp.le.f32.partialorder %v252, %v66
    %vm293 = vcmp.le.f32.partialorder %v252, %v67
    %vm294 = vcmp.le.f32.partialorder %v253, %v66
    %vm295 = vcmp.le.f32.partialorder %v253, %v67
    %vm296 = vcmp.le.f32.partialorder %v254, %v66
    %vm297 = vcmp.le.f32.partialorder %v254, %v67
    %vm298 = vcmp.le.f32.partialorder %v255, %v66
    %vm299 = vcmp.le.f32.partialorder %v255, %v67
    %vm300 = vcmp.le.f32.partialorder %v256, %v66
    %vm301 = vcmp.le.f32.partialorder %v256, %v67
    %v302 = vsel %vm272, %v242, 0.0
    %v303 = vsel %vm273, %v242, 0.0
    %v304 = vsel %vm274, %v243, 0.0
    %v305 = vsel %vm275, %v243, 0.0
    %v306 = vsel %vm276, %v244, 0.0
    %v307 = vsel %vm277, %v244, 0.0
    %v308 = vsel %vm278, %v245, 0.0
    %v309 = vsel %vm279, %v245, 0.0
    %v310 = vsel %vm280, %v246, 0.0
    %v311 = vsel %vm281, %v246, 0.0
    %v312 = vsel %vm282, %v247, 0.0
    %v313 = vsel %vm283, %v247, 0.0
    %v314 = vsel %vm284, %v248, 0.0
    %v315 = vsel %vm285, %v248, 0.0
    %v316 = vsel %vm286, %v249, 0.0
    %v317 = vsel %vm287, %v249, 0.0
    %v318 = vsel %vm288, %v250, 0.0
    %v319 = vsel %vm289, %v250, 0.0
    %v320 = vsel %vm290, %v251, 0.0
    %v321 = vsel %vm291, %v251, 0.0
    %v322 = vsel %vm292, %v252, 0.0
    %v323 = vsel %vm293, %v252, 0.0
    %v324 = vsel %vm294, %v253, 0.0
    %v325 = vsel %vm295, %v253, 0.0
    %v326 = vsel %vm296, %v254, 0.0
    %v327 = vsel %vm297, %v254, 0.0
    %v328 = vsel %vm298, %v255, 0.0
    %v329 = vsel %vm299, %v255, 0.0
    %v330 = vsel %vm300, %v256, 0.0
    %v331 = vsel %vm301, %v256, 0.0
    %v332 = vmax.f32 %v302, %v306
    %v333 = vmax.f32 %v304, %v308
    %v334 = vmax.f32 %v332, %v310
    %v335 = vmax.f32 %v333, %v312
    %v336 = vmax.f32 %v334, %v314
    %v337 = vmax.f32 %v335, %v316
    %v338 = vmax.f32 %v336, %v318
    %v339 = vmax.f32 %v337, %v320
    %v340 = vmax.f32 %v338, %v322
    %v341 = vmax.f32 %v339, %v324
    %v342 = vmax.f32 %v340, %v326
    %v343 = vmax.f32 %v341, %v328
    %v344 = vmax.f32 %v342, %v330
    %v345 = vmax.f32 %v344, %v343
    %v346 = vmax.f32 %v303, %v307
    %v347 = vmax.f32 %v305, %v309
    %v348 = vmax.f32 %v346, %v311
    %v349 = vmax.f32 %v347, %v313
    %v350 = vmax.f32 %v348, %v315
    %v351 = vmax.f32 %v349, %v317
    %v352 = vmax.f32 %v350, %v319
    %v353 = vmax.f32 %v351, %v321
    %v354 = vmax.f32 %v352, %v323
    %v355 = vmax.f32 %v353, %v325
    %v356 = vmax.f32 %v354, %v327
    %v357 = vmax.f32 %v355, %v329
    %v358 = vmax.f32 %v356, %v331
    %v359 = vmax.f32 %v358, %v357
    %v360 = vperm.slane %v220, 0
    %v361 = vperm.slane %v222, 0
    %v362 = vperm.slane %v224, 0
    %v363 = vperm.slane %v226, 0
    %v364 = vperm.slane %v228, 0
    %v365 = vperm.slane %v230, 0
    %v366 = vperm.slane %v232, 0
    %v367 = vperm.slane %v234, 0
    %v368 = vperm.slane %v235, 0
    %v369 = vperm.slane %v236, 0
    %v370 = vperm.slane %v237, 0
    %v371 = vperm.slane %v238, 0
    %v372 = vperm.slane %v239, 0
    %v373 = vperm.slane %v240, 0
    %v374 = vperm.slane %v241, 0
    %v390 = vsel %vm272, %v360, -3e+38
    %v391 = vsel %vm273, %v360, -3e+38
    %v392 = vsel %vm274, %v361, -3e+38
    %v393 = vsel %vm275, %v361, -3e+38
    %v394 = vsel %vm276, %v362, -3e+38
    %v395 = vsel %vm277, %v362, -3e+38
    %v396 = vsel %vm278, %v363, -3e+38
    %v397 = vsel %vm279, %v363, -3e+38
    %v398 = vsel %vm280, %v364, -3e+38
    %v399 = vsel %vm281, %v364, -3e+38
    %v400 = vsel %vm282, %v365, -3e+38
    %v401 = vsel %vm283, %v365, -3e+38
    %v402 = vsel %vm284, %v366, -3e+38
    %v403 = vsel %vm285, %v366, -3e+38
    %v404 = vsel %vm286, %v367, -3e+38
    %v405 = vsel %vm287, %v367, -3e+38
    %v406 = vsel %vm288, %v368, -3e+38
    %v407 = vsel %vm289, %v368, -3e+38
    %v408 = vsel %vm290, %v369, -3e+38
    %v409 = vsel %vm291, %v369, -3e+38
    %v410 = vsel %vm292, %v370, -3e+38
    %v411 = vsel %vm293, %v370, -3e+38
    %v412 = vsel %vm294, %v371, -3e+38
    %v413 = vsel %vm295, %v371, -3e+38
    %v414 = vsel %vm296, %v372, -3e+38
    %v415 = vsel %vm297, %v372, -3e+38
    %v416 = vsel %vm298, %v373, -3e+38
    %v417 = vsel %vm299, %v373, -3e+38
    %v418 = vsel %vm300, %v374, -3e+38
    %v419 = vsel %vm301, %v374, -3e+38
    %v420 = vmax.f32 %v390, %v394
    %v421 = vmax.f32 %v392, %v396
    %v422 = vmax.f32 %v420, %v398
    %v423 = vmax.f32 %v421, %v400
    %v424 = vmax.f32 %v422, %v402
    %v425 = vmax.f32 %v423, %v404
    %v426 = vmax.f32 %v424, %v406
    %v427 = vmax.f32 %v425, %v408
    %v428 = vmax.f32 %v426, %v410
    %v429 = vmax.f32 %v427, %v412
    %v430 = vmax.f32 %v428, %v414
    %v431 = vmax.f32 %v429, %v416
    %v432 = vmax.f32 %v430, %v418
    %v433 = vmax.f32 %v432, %v431
    %v434 = vmax.f32 %v391, %v395
    %v435 = vmax.f32 %v393, %v397
    %v436 = vmax.f32 %v434, %v399
    %v437 = vmax.f32 %v435, %v401
    %v438 = vmax.f32 %v436, %v403
    %v439 = vmax.f32 %v437, %v405
    %v440 = vmax.f32 %v438, %v407
    %v441 = vmax.f32 %v439, %v409
    %v442 = vmax.f32 %v440, %v411
    %v443 = vmax.f32 %v441, %v413
    %v444 = vmax.f32 %v442, %v415
    %v445 = vmax.f32 %v443, %v417
    %v446 = vmax.f32 %v444, %v419
    %v447 = vmax.f32 %v446, %v445
    %v448 = vsel %vm272, 3e+38, %v242
    %v449 = vsel %vm273, 3e+38, %v242
    %v450 = vsel %vm274, 3e+38, %v243
    %v451 = vsel %vm275, 3e+38, %v243
    %v452 = vsel %vm276, 3e+38, %v244
    %v453 = vsel %vm277, 3e+38, %v244
    %v454 = vsel %vm278, 3e+38, %v245
    %v455 = vsel %vm279, 3e+38, %v245
    %v456 = vsel %vm280, 3e+38, %v246
    %v457 = vsel %vm281, 3e+38, %v246
    %v458 = vsel %vm282, 3e+38, %v247
    %v459 = vsel %vm283, 3e+38, %v247
    %v460 = vsel %vm284, 3e+38, %v248
    %v461 = vsel %vm285, 3e+38, %v248
    %v462 = vsel %vm286, 3e+38, %v249
    %v463 = vsel %vm287, 3e+38, %v249
    %v464 = vsel %vm288, 3e+38, %v250
    %v465 = vsel %vm289, 3e+38, %v250
    %v466 = vsel %vm290, 3e+38, %v251
    %v467 = vsel %vm291, 3e+38, %v251
    %v468 = vsel %vm292, 3e+38, %v252
    %v469 = vsel %vm293, 3e+38, %v252
    %v470 = vsel %vm294, 3e+38, %v253
    %v471 = vsel %vm295, 3e+38, %v253
    %v472 = vsel %vm296, 3e+38, %v254
    %v473 = vsel %vm297, 3e+38, %v254
    %v474 = vsel %vm298, 3e+38, %v255
    %v475 = vsel %vm299, 3e+38, %v255
    %v476 = vsel %vm300, 3e+38, %v256
    %v477 = vsel %vm301, 3e+38, %v256
    %v478 = vmin.f32 %v448, %v452
    %v479 = vmin.f32 %v450, %v454
    %v480 = vmin.f32 %v478, %v456
    %v481 = vmin.f32 %v479, %v458
    %v482 = vmin.f32 %v480, %v460
    %v483 = vmin.f32 %v481, %v462
    %v484 = vmin.f32 %v482, %v464
    %v485 = vmin.f32 %v483, %v466
    %v486 = vmin.f32 %v484, %v468
    %v487 = vmin.f32 %v485, %v470
    %v488 = vmin.f32 %v486, %v472
    %v489 = vmin.f32 %v487, %v474
    %v490 = vmin.f32 %v488, %v476
    %v491 = vmin.f32 %v490, %v489
    %v492 = vmin.f32 %v449, %v453
    %v493 = vmin.f32 %v451, %v455
    %v494 = vmin.f32 %v492, %v457
    %v495 = vmin.f32 %v493, %v459
    %v496 = vmin.f32 %v494, %v461
    %v497 = vmin.f32 %v495, %v463
    %v498 = vmin.f32 %v496, %v465
    %v499 = vmin.f32 %v497, %v467
    %v500 = vmin.f32 %v498, %v469
    %v501 = vmin.f32 %v499, %v471
    %v502 = vmin.f32 %v500, %v473
    %v503 = vmin.f32 %v501, %v475
    %v504 = vmin.f32 %v502, %v477
    %v505 = vmin.f32 %v504, %v503
    %v506 = vsel %vm272, 3e+38, %v360
    %v507 = vsel %vm273, 3e+38, %v360
    %v508 = vsel %vm274, 3e+38, %v361
    %v509 = vsel %vm275, 3e+38, %v361
    %v510 = vsel %vm276, 3e+38, %v362
    %v511 = vsel %vm277, 3e+38, %v362
    %v512 = vsel %vm278, 3e+38, %v363
    %v513 = vsel %vm279, 3e+38, %v363
    %v514 = vsel %vm280, 3e+38, %v364
    %v515 = vsel %vm281, 3e+38, %v364
    %v516 = vsel %vm282, 3e+38, %v365
    %v517 = vsel %vm283, 3e+38, %v365
    %v518 = vsel %vm284, 3e+38, %v366
    %v519 = vsel %vm285, 3e+38, %v366
    %v520 = vsel %vm286, 3e+38, %v367
    %v521 = vsel %vm287, 3e+38, %v367
    %v522 = vsel %vm288, 3e+38, %v368
    %v523 = vsel %vm289, 3e+38, %v368
    %v524 = vsel %vm290, 3e+38, %v369
    %v525 = vsel %vm291, 3e+38, %v369
    %v526 = vsel %vm292, 3e+38, %v370
    %v527 = vsel %vm293, 3e+38, %v370
    %v528 = vsel %vm294, 3e+38, %v371
    %v529 = vsel %vm295, 3e+38, %v371
    %v530 = vsel %vm296, 3e+38, %v372
    %v531 = vsel %vm297, 3e+38, %v372
    %v532 = vsel %vm298, 3e+38, %v373
    %v533 = vsel %vm299, 3e+38, %v373
    %v534 = vsel %vm300, 3e+38, %v374
    %v535 = vsel %vm301, 3e+38, %v374
    %v536 = vmin.f32 %v506, %v510
    %v537 = vmin.f32 %v508, %v512
    %v538 = vmin.f32 %v536, %v514
    %v539 = vmin.f32 %v537, %v516
    %v540 = vmin.f32 %v538, %v518
    %v541 = vmin.f32 %v539, %v520
    %v542 = vmin.f32 %v540, %v522
    %v543 = vmin.f32 %v541, %v524
    %v544 = vmin.f32 %v542, %v526
    %v545 = vmin.f32 %v543, %v528
    %v546 = vmin.f32 %v544, %v530
    %v547 = vmin.f32 %v545, %v532
    %v548 = vmin.f32 %v546, %v534
    %v549 = vmin.f32 %v548, %v547
    %v550 = vmin.f32 %v507, %v511
    %v551 = vmin.f32 %v509, %v513
    %v552 = vmin.f32 %v550, %v515
    %v553 = vmin.f32 %v551, %v517
    %v554 = vmin.f32 %v552, %v519
    %v555 = vmin.f32 %v553, %v521
    %v556 = vmin.f32 %v554, %v523
    %v557 = vmin.f32 %v555, %v525
    %v558 = vmin.f32 %v556, %v527
    %v559 = vmin.f32 %v557, %v529
    %v560 = vmin.f32 %v558, %v531
    %v561 = vmin.f32 %v559, %v533
    %v562 = vmin.f32 %v560, %v535
    %v563 = vmin.f32 %v562, %v561
    %v564 = vperm.slane %v200, 6
    %vm565 = vcmp.le.f32.partialorder %v564, %v66
    %vm566 = vcmp.le.f32.partialorder %v564, %v67
    %v567 = vsel %vm565, %v345, %v491
    %v568 = vsel %vm566, %v359, %v505
    %v569 = vsel %vm565, %v433, %v549
    %v570 = vsel %vm566, %v447, %v563
    %v571 = vsub.f32 %v567, %v345
    %v572 = vsub.f32 %v568, %v359
    %vm573 = vcmp.lt.f32.partialorder %v571, 1e-05
    %vm574 = vcmp.lt.f32.partialorder %v572, 1e-05
    %v575 = vsel %vm573, 1.0, %v571
    %v576 = vsel %vm574, 1.0, %v572
    %v577 = vsub.f32 %v66, %v345
    %v578 = vsub.f32 %v67, %v359
    %v579 = vrcp.pop %v575
    %v580 = vmul.f32 %v575, %v579
    %v581 = vsub.f32 1.0, %v580
    %v582 = vmul.f32 %v579, %v581
    %v583 = vadd.f32 %v579, %v582
    %vm584 = vweird.f32 %v575
    %vm585 = vweird.f32 %v579
    %vm586 = vmor %vm584, %vm585
    %v587 = vsel %vm586, %v579, %v583
    %v588 = vand.u32 2147483647, %v575
    %vm589 = vcmp.eq.f32.partialorder %v588, 8.507059e+37
    %v590 = vand.u32 %v575, 2147483648
    %v591 = vor.u32 1.1754944e-38, %v590
    %v592 = vsel %vm589, %v591, %v587
    %v593 = vmul.f32 %v577, %v592
    %v594 = vrcp.pop %v576
    %v595 = vmul.f32 %v576, %v594
    %v596 = vsub.f32 1.0, %v595
    %v597 = vmul.f32 %v594, %v596
    %v598 = vadd.f32 %v594, %v597
    %vm599 = vweird.f32 %v576
    %vm600 = vweird.f32 %v594
    %vm601 = vmor %vm599, %vm600
    %v602 = vsel %vm601, %v594, %v598
    %v603 = vand.u32 2147483647, %v576
    %vm604 = vcmp.eq.f32.partialorder %v603, 8.507059e+37
    %v605 = vand.u32 %v576, 2147483648
    %v606 = vor.u32 1.1754944e-38, %v605
    %v607 = vsel %vm604, %v606, %v602
    %v608 = vmul.f32 %v578, %v607
    %v609 = vsub.f32 %v569, %v433
    %v610 = vsub.f32 %v570, %v447
    %v611 = vmul.f32 %v593, %v609
    %v612 = vmul.f32 %v608, %v610
    %v613 = vadd.f32 %v433, %v611
    %v614 = vadd.f32 %v447, %v612
    %v617 = vrot.slane %v613, 1
    %v618 = vrot.slane %v613, 2
    %v619 = vrot.slane %v613, 3
    %v620 = vrot.slane %v613, 4
    %v621 = vrot.slane %v613, 5
    %v622 = vrot.slane %v613, 6
    %v623 = vrot.slane %v613, 7
    %v624 = vrot.slane %v614, 1
    %v625 = vrot.slane %v614, 2
    %v626 = vrot.slane %v614, 3
    %v627 = vrot.slane %v614, 4
    %v628 = vrot.slane %v614, 5
    %v629 = vrot.slane %v614, 6
    %v630 = vrot.slane %v614, 7
    %v631 = vperm.slane %v613, 0
    %v632 = vperm.slane %v617, 0
    %v633 = vperm.slane %v618, 0
    %v634 = vperm.slane %v619, 0
    %v635 = vperm.slane %v620, 0
    %v636 = vperm.slane %v621, 0
    %v637 = vperm.slane %v622, 0
    %v638 = vperm.slane %v623, 0
    %v639 = vperm.slane %v614, 0
    %v640 = vperm.slane %v624, 0
    %v641 = vperm.slane %v625, 0
    %v642 = vperm.slane %v626, 0
    %v643 = vperm.slane %v627, 0
    %v644 = vperm.slane %v628, 0
    %v645 = vperm.slane %v629, 0
    %v646 = vperm.slane %v630, 0
    %vm663 = vcmp.lt.f32.partialorder %v631, %v62
    %vm664 = vcmp.lt.f32.partialorder %v631, %v63
    %vm665 = vcmp.lt.f32.partialorder %v632, %v62
    %vm666 = vcmp.lt.f32.partialorder %v632, %v63
    %vm667 = vcmp.lt.f32.partialorder %v633, %v62
    %vm668 = vcmp.lt.f32.partialorder %v633, %v63
    %vm669 = vcmp.lt.f32.partialorder %v634, %v62
    %vm670 = vcmp.lt.f32.partialorder %v634, %v63
    %vm671 = vcmp.lt.f32.partialorder %v635, %v62
    %vm672 = vcmp.lt.f32.partialorder %v635, %v63
    %vm673 = vcmp.lt.f32.partialorder %v636, %v62
    %vm674 = vcmp.lt.f32.partialorder %v636, %v63
    %vm675 = vcmp.lt.f32.partialorder %v637, %v62
    %vm676 = vcmp.lt.f32.partialorder %v637, %v63
    %vm677 = vcmp.lt.f32.partialorder %v638, %v62
    %vm678 = vcmp.lt.f32.partialorder %v638, %v63
    %vm679 = vcmp.lt.f32.partialorder %v639, %v62
    %vm680 = vcmp.lt.f32.partialorder %v639, %v63
    %vm681 = vcmp.lt.f32.partialorder %v640, %v62
    %vm682 = vcmp.lt.f32.partialorder %v640, %v63
    %vm683 = vcmp.lt.f32.partialorder %v641, %v62
    %vm684 = vcmp.lt.f32.partialorder %v641, %v63
    %vm685 = vcmp.lt.f32.partialorder %v642, %v62
    %vm686 = vcmp.lt.f32.partialorder %v642, %v63
    %vm687 = vcmp.lt.f32.partialorder %v643, %v62
    %vm688 = vcmp.lt.f32.partialorder %v643, %v63
    %vm689 = vcmp.lt.f32.partialorder %v644, %v62
    %vm690 = vcmp.lt.f32.partialorder %v644, %v63
    %vm691 = vcmp.lt.f32.partialorder %v645, %v62
    %vm692 = vcmp.lt.f32.partialorder %v645, %v63
    %vm693 = vcmp.lt.f32.partialorder %v646, %v62
    %vm694 = vcmp.lt.f32.partialorder %v646, %v63
    %v695 = vsel %vm663, 1, 0
    %v696 = vsel %vm664, 1, 0
    %v697 = vsel %vm665, 1, 0
    %v698 = vsel %vm666, 1, 0
    %v699 = vsel %vm667, 1, 0
    %v700 = vsel %vm668, 1, 0
    %v701 = vsel %vm669, 1, 0
    %v702 = vsel %vm670, 1, 0
    %v703 = vsel %vm671, 1, 0
    %v704 = vsel %vm672, 1, 0
    %v705 = vsel %vm673, 1, 0
    %v706 = vsel %vm674, 1, 0
    %v707 = vsel %vm675, 1, 0
    %v708 = vsel %vm676, 1, 0
    %v709 = vsel %vm677, 1, 0
    %v710 = vsel %vm678, 1, 0
    %v711 = vsel %vm679, 1, 0
    %v712 = vsel %vm680, 1, 0
    %v713 = vsel %vm681, 1, 0
    %v714 = vsel %vm682, 1, 0
    %v715 = vsel %vm683, 1, 0
    %v716 = vsel %vm684, 1, 0
    %v717 = vsel %vm685, 1, 0
    %v718 = vsel %vm686, 1, 0
    %v719 = vsel %vm687, 1, 0
    %v720 = vsel %vm688, 1, 0
    %v721 = vsel %vm689, 1, 0
    %v722 = vsel %vm690, 1, 0
    %v723 = vsel %vm691, 1, 0
    %v724 = vsel %vm692, 1, 0
    %v725 = vsel %vm693, 1, 0
    %v726 = vsel %vm694, 1, 0
    %v727 = vadd.s32 %v695, %v699
    %v728 = vadd.s32 %v697, %v701
    %v729 = vadd.s32 %v727, %v703
    %v730 = vadd.s32 %v728, %v705
    %v731 = vadd.s32 %v729, %v707
    %v732 = vadd.s32 %v730, %v709
    %v733 = vadd.s32 %v731, %v711
    %v734 = vadd.s32 %v732, %v713
    %v735 = vadd.s32 %v733, %v715
    %v736 = vadd.s32 %v734, %v717
    %v737 = vadd.s32 %v735, %v719
    %v738 = vadd.s32 %v736, %v721
    %v739 = vadd.s32 %v737, %v723
    %v740 = vadd.s32 %v738, %v725
    %v741 = vadd.s32 %v739, %v740
    %v742 = vadd.s32 %v696, %v700
    %v743 = vadd.s32 %v698, %v702
    %v744 = vadd.s32 %v742, %v704
    %v745 = vadd.s32 %v743, %v706
    %v746 = vadd.s32 %v744, %v708
    %v747 = vadd.s32 %v745, %v710
    %v748 = vadd.s32 %v746, %v712
    %v749 = vadd.s32 %v747, %v714
    %v750 = vadd.s32 %v748, %v716
    %v751 = vadd.s32 %v749, %v718
    %v752 = vadd.s32 %v750, %v720
    %v753 = vadd.s32 %v751, %v722
    %v754 = vadd.s32 %v752, %v724
    %v755 = vadd.s32 %v753, %v726
    %v756 = vadd.s32 %v754, %v755
    %v757 = vrot.slane %v62, 1
    %v758 = vrot.slane %v62, 2
    %v759 = vrot.slane %v62, 3
    %v760 = vrot.slane %v62, 4
    %v761 = vrot.slane %v62, 5
    %v762 = vrot.slane %v62, 6
    %v763 = vrot.slane %v63, 1
    %v764 = vrot.slane %v63, 2
    %v765 = vrot.slane %v63, 3
    %v766 = vrot.slane %v63, 4
    %v767 = vrot.slane %v63, 5
    %v768 = vrot.slane %v63, 6
    %v769 = vperm.slane %v62, 0
    %v770 = vperm.slane %v757, 0
    %v771 = vperm.slane %v758, 0
    %v772 = vperm.slane %v759, 0
    %v773 = vperm.slane %v760, 0
    %v774 = vperm.slane %v761, 0
    %v775 = vperm.slane %v762, 0
    %v776 = vperm.slane %v71, 0
    %v777 = vperm.slane %v63, 0
    %v778 = vperm.slane %v763, 0
    %v779 = vperm.slane %v764, 0
    %v780 = vperm.slane %v765, 0
    %v781 = vperm.slane %v766, 0
    %v782 = vperm.slane %v767, 0
    %v783 = vperm.slane %v768, 0
    %v784 = vperm.slane %v72, 0
    %vm801 = vcmp.le.f32.partialorder %v769, %v613
    %vm802 = vcmp.le.f32.partialorder %v769, %v614
    %vm803 = vcmp.le.f32.partialorder %v770, %v613
    %vm804 = vcmp.le.f32.partialorder %v770, %v614
    %vm805 = vcmp.le.f32.partialorder %v771, %v613
    %vm806 = vcmp.le.f32.partialorder %v771, %v614
    %vm807 = vcmp.le.f32.partialorder %v772, %v613
    %vm808 = vcmp.le.f32.partialorder %v772, %v614
    %vm809 = vcmp.le.f32.partialorder %v773, %v613
    %vm810 = vcmp.le.f32.partialorder %v773, %v614
    %vm811 = vcmp.le.f32.partialorder %v774, %v613
    %vm812 = vcmp.le.f32.partialorder %v774, %v614
    %vm813 = vcmp.le.f32.partialorder %v775, %v613
    %vm814 = vcmp.le.f32.partialorder %v775, %v614
    %vm815 = vcmp.le.f32.partialorder %v776, %v613
    %vm816 = vcmp.le.f32.partialorder %v776, %v614
    %vm817 = vcmp.le.f32.partialorder %v777, %v613
    %vm818 = vcmp.le.f32.partialorder %v777, %v614
    %vm819 = vcmp.le.f32.partialorder %v778, %v613
    %vm820 = vcmp.le.f32.partialorder %v778, %v614
    %vm821 = vcmp.le.f32.partialorder %v779, %v613
    %vm822 = vcmp.le.f32.partialorder %v779, %v614
    %vm823 = vcmp.le.f32.partialorder %v780, %v613
    %vm824 = vcmp.le.f32.partialorder %v780, %v614
    %vm825 = vcmp.le.f32.partialorder %v781, %v613
    %vm826 = vcmp.le.f32.partialorder %v781, %v614
    %vm827 = vcmp.le.f32.partialorder %v782, %v613
    %vm828 = vcmp.le.f32.partialorder %v782, %v614
    %vm829 = vcmp.le.f32.partialorder %v783, %v613
    %vm830 = vcmp.le.f32.partialorder %v783, %v614
    %vm831 = vcmp.le.f32.partialorder %v784, %v613
    %vm832 = vcmp.le.f32.partialorder %v784, %v614
    %v833 = vsel %vm801, 1, 0
    %v834 = vsel %vm802, 1, 0
    %v835 = vsel %vm803, 1, 0
    %v836 = vsel %vm804, 1, 0
    %v837 = vsel %vm805, 1, 0
    %v838 = vsel %vm806, 1, 0
    %v839 = vsel %vm807, 1, 0
    %v840 = vsel %vm808, 1, 0
    %v841 = vsel %vm809, 1, 0
    %v842 = vsel %vm810, 1, 0
    %v843 = vsel %vm811, 1, 0
    %v844 = vsel %vm812, 1, 0
    %v845 = vsel %vm813, 1, 0
    %v846 = vsel %vm814, 1, 0
    %v847 = vsel %vm815, 1, 0
    %v848 = vsel %vm816, 1, 0
    %v849 = vsel %vm817, 1, 0
    %v850 = vsel %vm818, 1, 0
    %v851 = vsel %vm819, 1, 0
    %v852 = vsel %vm820, 1, 0
    %v853 = vsel %vm821, 1, 0
    %v854 = vsel %vm822, 1, 0
    %v855 = vsel %vm823, 1, 0
    %v856 = vsel %vm824, 1, 0
    %v857 = vsel %vm825, 1, 0
    %v858 = vsel %vm826, 1, 0
    %v859 = vsel %vm827, 1, 0
    %v860 = vsel %vm828, 1, 0
    %v861 = vsel %vm829, 1, 0
    %v862 = vsel %vm830, 1, 0
    %v863 = vsel %vm831, 1, 0
    %v864 = vsel %vm832, 1, 0
    %v865 = vadd.s32 %v833, %v837
    %v866 = vadd.s32 %v835, %v839
    %v867 = vadd.s32 %v865, %v841
    %v868 = vadd.s32 %v866, %v843
    %v869 = vadd.s32 %v867, %v845
    %v870 = vadd.s32 %v868, %v847
    %v871 = vadd.s32 %v869, %v849
    %v872 = vadd.s32 %v870, %v851
    %v873 = vadd.s32 %v871, %v853
    %v874 = vadd.s32 %v872, %v855
    %v875 = vadd.s32 %v873, %v857
    %v876 = vadd.s32 %v874, %v859
    %v877 = vadd.s32 %v875, %v861
    %v878 = vadd.s32 %v876, %v863
    %v879 = vadd.s32 %v877, %v878
    %v880 = vadd.s32 %v834, %v838
    %v881 = vadd.s32 %v836, %v840
    %v882 = vadd.s32 %v880, %v842
    %v883 = vadd.s32 %v881, %v844
    %v884 = vadd.s32 %v882, %v846
    %v885 = vadd.s32 %v883, %v848
    %v886 = vadd.s32 %v884, %v850
    %v887 = vadd.s32 %v885, %v852
    %v888 = vadd.s32 %v886, %v854
    %v889 = vadd.s32 %v887, %v856
    %v890 = vadd.s32 %v888, %v858
    %v891 = vadd.s32 %v889, %v860
    %v892 = vadd.s32 %v890, %v862
    %v893 = vadd.s32 %v891, %v864
    %v894 = vadd.s32 %v892, %v893
    %v895 = vlaneseq
    %v896 = vshrl.u32 %v895, 7
    %v897 = vadd.s32 %v896, 8
    %v898 = vadd.s32 %v896, %v741
    %v899 = vadd.s32 %v897, %v756
    %v900 = vadd.s32 %v896, %v879
    %v901 = vadd.s32 %v897, %v894
    %v902 = vadd.s32 %v896, 16
    %v903 = vadd.s32 %v896, 24
    %v904 = vrot.slane %v898, 1
    %v905 = vrot.slane %v898, 2
    %v906 = vrot.slane %v898, 3
    %v907 = vrot.slane %v898, 4
    %v908 = vrot.slane %v898, 5
    %v909 = vrot.slane %v898, 6
    %v910 = vrot.slane %v898, 7
    %v911 = vrot.slane %v899, 1
    %v912 = vrot.slane %v899, 2
    %v913 = vrot.slane %v899, 3
    %v914 = vrot.slane %v899, 4
    %v915 = vrot.slane %v899, 5
    %v916 = vrot.slane %v899, 6
    %v917 = vrot.slane %v899, 7
    %v918 = vperm.slane %v898, 0
    %v919 = vperm.slane %v904, 0
    %v920 = vperm.slane %v905, 0
    %v921 = vperm.slane %v906, 0
    %v922 = vperm.slane %v907, 0
    %v923 = vperm.slane %v908, 0
    %v924 = vperm.slane %v909, 0
    %v925 = vperm.slane %v910, 0
    %v926 = vperm.slane %v899, 0
    %v927 = vperm.slane %v911, 0
    %v928 = vperm.slane %v912, 0
    %v929 = vperm.slane %v913, 0
    %v930 = vperm.slane %v914, 0
    %v931 = vperm.slane %v915, 0
    %v932 = vperm.slane %v916, 0
    %v933 = vperm.slane %v917, 0
    %vm934 = vcmp.eq.s32.totalorder %v918, %v896
    %vm935 = vcmp.eq.s32.totalorder %v918, %v897
    %vm936 = vcmp.eq.s32.totalorder %v918, %v902
    %vm937 = vcmp.eq.s32.totalorder %v918, %v903
    %vm938 = vcmp.eq.s32.totalorder %v919, %v896
    %vm939 = vcmp.eq.s32.totalorder %v919, %v897
    %vm940 = vcmp.eq.s32.totalorder %v919, %v902
    %vm941 = vcmp.eq.s32.totalorder %v919, %v903
    %vm942 = vcmp.eq.s32.totalorder %v920, %v896
    %vm943 = vcmp.eq.s32.totalorder %v920, %v897
    %vm944 = vcmp.eq.s32.totalorder %v920, %v902
    %vm945 = vcmp.eq.s32.totalorder %v920, %v903
    %vm946 = vcmp.eq.s32.totalorder %v921, %v896
    %vm947 = vcmp.eq.s32.totalorder %v921, %v897
    %vm948 = vcmp.eq.s32.totalorder %v921, %v902
    %vm949 = vcmp.eq.s32.totalorder %v921, %v903
    %vm950 = vcmp.eq.s32.totalorder %v922, %v896
    %vm951 = vcmp.eq.s32.totalorder %v922, %v897
    %vm952 = vcmp.eq.s32.totalorder %v922, %v902
    %vm953 = vcmp.eq.s32.totalorder %v922, %v903
    %vm954 = vcmp.eq.s32.totalorder %v923, %v896
    %vm955 = vcmp.eq.s32.totalorder %v923, %v897
    %vm956 = vcmp.eq.s32.totalorder %v923, %v902
    %vm957 = vcmp.eq.s32.totalorder %v923, %v903
    %vm958 = vcmp.eq.s32.totalorder %v924, %v896
    %vm959 = vcmp.eq.s32.totalorder %v924, %v897
    %vm960 = vcmp.eq.s32.totalorder %v924, %v902
    %vm961 = vcmp.eq.s32.totalorder %v924, %v903
    %vm962 = vcmp.eq.s32.totalorder %v925, %v896
    %vm963 = vcmp.eq.s32.totalorder %v925, %v897
    %vm964 = vcmp.eq.s32.totalorder %v925, %v902
    %vm965 = vcmp.eq.s32.totalorder %v925, %v903
    %vm966 = vcmp.eq.s32.totalorder %v926, %v896
    %vm967 = vcmp.eq.s32.totalorder %v926, %v897
    %vm968 = vcmp.eq.s32.totalorder %v926, %v902
    %vm969 = vcmp.eq.s32.totalorder %v926, %v903
    %vm970 = vcmp.eq.s32.totalorder %v927, %v896
    %vm971 = vcmp.eq.s32.totalorder %v927, %v897
    %vm972 = vcmp.eq.s32.totalorder %v927, %v902
    %vm973 = vcmp.eq.s32.totalorder %v927, %v903
    %vm974 = vcmp.eq.s32.totalorder %v928, %v896
    %vm975 = vcmp.eq.s32.totalorder %v928, %v897
    %vm976 = vcmp.eq.s32.totalorder %v928, %v902
    %vm977 = vcmp.eq.s32.totalorder %v928, %v903
    %vm978 = vcmp.eq.s32.totalorder %v929, %v896
    %vm979 = vcmp.eq.s32.totalorder %v929, %v897
    %vm980 = vcmp.eq.s32.totalorder %v929, %v902
    %vm981 = vcmp.eq.s32.totalorder %v929, %v903
    %vm982 = vcmp.eq.s32.totalorder %v930, %v896
    %vm983 = vcmp.eq.s32.totalorder %v930, %v897
    %vm984 = vcmp.eq.s32.totalorder %v930, %v902
    %vm985 = vcmp.eq.s32.totalorder %v930, %v903
    %vm986 = vcmp.eq.s32.totalorder %v931, %v896
    %vm987 = vcmp.eq.s32.totalorder %v931, %v897
    %vm988 = vcmp.eq.s32.totalorder %v931, %v902
    %vm989 = vcmp.eq.s32.totalorder %v931, %v903
    %vm990 = vcmp.eq.s32.totalorder %v932, %v896
    %vm991 = vcmp.eq.s32.totalorder %v932, %v897
    %vm992 = vcmp.eq.s32.totalorder %v932, %v902
    %vm993 = vcmp.eq.s32.totalorder %v932, %v903
    %vm994 = vcmp.eq.s32.totalorder %v933, %v896
    %vm995 = vcmp.eq.s32.totalorder %v933, %v897
    %vm996 = vcmp.eq.s32.totalorder %v933, %v902
    %vm997 = vcmp.eq.s32.totalorder %v933, %v903
    %v998 = vsel %vm934, %v769, 0.0
    %v999 = vsel %vm935, %v769, 0.0
    %v1000 = vsel %vm936, %v769, 0.0
    %v1001 = vsel %vm937, %v769, 0.0
    %v1002 = vsel %vm938, %v770, 0.0
    %v1003 = vsel %vm939, %v770, 0.0
    %v1004 = vsel %vm940, %v770, 0.0
    %v1005 = vsel %vm941, %v770, 0.0
    %v1006 = vsel %vm942, %v771, 0.0
    %v1007 = vsel %vm943, %v771, 0.0
    %v1008 = vsel %vm944, %v771, 0.0
    %v1009 = vsel %vm945, %v771, 0.0
    %v1010 = vsel %vm946, %v772, 0.0
    %v1011 = vsel %vm947, %v772, 0.0
    %v1012 = vsel %vm948, %v772, 0.0
    %v1013 = vsel %vm949, %v772, 0.0
    %v1014 = vsel %vm950, %v773, 0.0
    %v1015 = vsel %vm951, %v773, 0.0
    %v1016 = vsel %vm952, %v773, 0.0
    %v1017 = vsel %vm953, %v773, 0.0
    %v1018 = vsel %vm954, %v774, 0.0
    %v1019 = vsel %vm955, %v774, 0.0
    %v1020 = vsel %vm956, %v774, 0.0
    %v1021 = vsel %vm957, %v774, 0.0
    %v1022 = vsel %vm958, %v775, 0.0
    %v1023 = vsel %vm959, %v775, 0.0
    %v1024 = vsel %vm960, %v775, 0.0
    %v1025 = vsel %vm961, %v775, 0.0
    %v1026 = vsel %vm962, %v776, 0.0
    %v1027 = vsel %vm963, %v776, 0.0
    %v1028 = vsel %vm964, %v776, 0.0
    %v1029 = vsel %vm965, %v776, 0.0
    %v1030 = vsel %vm966, %v777, 0.0
    %v1031 = vsel %vm967, %v777, 0.0
    %v1032 = vsel %vm968, %v777, 0.0
    %v1033 = vsel %vm969, %v777, 0.0
    %v1034 = vsel %vm970, %v778, 0.0
    %v1035 = vsel %vm971, %v778, 0.0
    %v1036 = vsel %vm972, %v778, 0.0
    %v1037 = vsel %vm973, %v778, 0.0
    %v1038 = vsel %vm974, %v779, 0.0
    %v1039 = vsel %vm975, %v779, 0.0
    %v1040 = vsel %vm976, %v779, 0.0
    %v1041 = vsel %vm977, %v779, 0.0
    %v1042 = vsel %vm978, %v780, 0.0
    %v1043 = vsel %vm979, %v780, 0.0
    %v1044 = vsel %vm980, %v780, 0.0
    %v1045 = vsel %vm981, %v780, 0.0
    %v1046 = vsel %vm982, %v781, 0.0
    %v1047 = vsel %vm983, %v781, 0.0
    %v1048 = vsel %vm984, %v781, 0.0
    %v1049 = vsel %vm985, %v781, 0.0
    %v1050 = vsel %vm986, %v782, 0.0
    %v1051 = vsel %vm987, %v782, 0.0
    %v1052 = vsel %vm988, %v782, 0.0
    %v1053 = vsel %vm989, %v782, 0.0
    %v1054 = vsel %vm990, %v783, 0.0
    %v1055 = vsel %vm991, %v783, 0.0
    %v1056 = vsel %vm992, %v783, 0.0
    %v1057 = vsel %vm993, %v783, 0.0
    %v1058 = vsel %vm994, %v784, 0.0
    %v1059 = vsel %vm995, %v784, 0.0
    %v1060 = vsel %vm996, %v784, 0.0
    %v1061 = vsel %vm997, %v784, 0.0
    %v1062 = vadd.f32 %v998, %v1002
    %v1063 = vadd.f32 %v1062, %v1006
    %v1064 = vadd.f32 %v1063, %v1010
    %v1065 = vadd.f32 %v1064, %v1014
    %v1066 = vadd.f32 %v1065, %v1018
    %v1067 = vadd.f32 %v1066, %v1022
    %v1068 = vadd.f32 %v1067, %v1026
    %v1069 = vadd.f32 %v1068, %v1030
    %v1070 = vadd.f32 %v1069, %v1034
    %v1071 = vadd.f32 %v1070, %v1038
    %v1072 = vadd.f32 %v1071, %v1042
    %v1073 = vadd.f32 %v1072, %v1046
    %v1074 = vadd.f32 %v1073, %v1050
    %v1075 = vadd.f32 %v1074, %v1054
    %v1076 = vadd.f32 %v1075, %v1058
    %v1077 = vadd.f32 %v999, %v1003
    %v1078 = vadd.f32 %v1077, %v1007
    %v1079 = vadd.f32 %v1078, %v1011
    %v1080 = vadd.f32 %v1079, %v1015
    %v1081 = vadd.f32 %v1080, %v1019
    %v1082 = vadd.f32 %v1081, %v1023
    %v1083 = vadd.f32 %v1082, %v1027
    %v1084 = vadd.f32 %v1083, %v1031
    %v1085 = vadd.f32 %v1084, %v1035
    %v1086 = vadd.f32 %v1085, %v1039
    %v1087 = vadd.f32 %v1086, %v1043
    %v1088 = vadd.f32 %v1087, %v1047
    %v1089 = vadd.f32 %v1088, %v1051
    %v1090 = vadd.f32 %v1089, %v1055
    %v1091 = vadd.f32 %v1090, %v1059
    %v1092 = vadd.f32 %v1000, %v1004
    %v1093 = vadd.f32 %v1092, %v1008
    %v1094 = vadd.f32 %v1093, %v1012
    %v1095 = vadd.f32 %v1094, %v1016
    %v1096 = vadd.f32 %v1095, %v1020
    %v1097 = vadd.f32 %v1096, %v1024
    %v1098 = vadd.f32 %v1097, %v1028
    %v1099 = vadd.f32 %v1098, %v1032
    %v1100 = vadd.f32 %v1099, %v1036
    %v1101 = vadd.f32 %v1100, %v1040
    %v1102 = vadd.f32 %v1101, %v1044
    %v1103 = vadd.f32 %v1102, %v1048
    %v1104 = vadd.f32 %v1103, %v1052
    %v1105 = vadd.f32 %v1104, %v1056
    %v1106 = vadd.f32 %v1105, %v1060
    %v1107 = vadd.f32 %v1001, %v1005
    %v1108 = vadd.f32 %v1107, %v1009
    %v1109 = vadd.f32 %v1108, %v1013
    %v1110 = vadd.f32 %v1109, %v1017
    %v1111 = vadd.f32 %v1110, %v1021
    %v1112 = vadd.f32 %v1111, %v1025
    %v1113 = vadd.f32 %v1112, %v1029
    %v1114 = vadd.f32 %v1113, %v1033
    %v1115 = vadd.f32 %v1114, %v1037
    %v1116 = vadd.f32 %v1115, %v1041
    %v1117 = vadd.f32 %v1116, %v1045
    %v1118 = vadd.f32 %v1117, %v1049
    %v1119 = vadd.f32 %v1118, %v1053
    %v1120 = vadd.f32 %v1119, %v1057
    %v1121 = vadd.f32 %v1120, %v1061
    %v1122 = vrot.slane %v900, 1
    %v1123 = vrot.slane %v900, 2
    %v1124 = vrot.slane %v900, 3
    %v1125 = vrot.slane %v900, 4
    %v1126 = vrot.slane %v900, 5
    %v1127 = vrot.slane %v900, 6
    %v1128 = vrot.slane %v900, 7
    %v1129 = vrot.slane %v901, 1
    %v1130 = vrot.slane %v901, 2
    %v1131 = vrot.slane %v901, 3
    %v1132 = vrot.slane %v901, 4
    %v1133 = vrot.slane %v901, 5
    %v1134 = vrot.slane %v901, 6
    %v1135 = vrot.slane %v901, 7
    %v1136 = vperm.slane %v900, 0
    %v1137 = vperm.slane %v1122, 0
    %v1138 = vperm.slane %v1123, 0
    %v1139 = vperm.slane %v1124, 0
    %v1140 = vperm.slane %v1125, 0
    %v1141 = vperm.slane %v1126, 0
    %v1142 = vperm.slane %v1127, 0
    %v1143 = vperm.slane %v1128, 0
    %v1144 = vperm.slane %v901, 0
    %v1145 = vperm.slane %v1129, 0
    %v1146 = vperm.slane %v1130, 0
    %v1147 = vperm.slane %v1131, 0
    %v1148 = vperm.slane %v1132, 0
    %v1149 = vperm.slane %v1133, 0
    %v1150 = vperm.slane %v1134, 0
    %v1151 = vperm.slane %v1135, 0
    %vm1152 = vcmp.eq.s32.totalorder %v1136, %v896
    %vm1153 = vcmp.eq.s32.totalorder %v1136, %v897
    %vm1154 = vcmp.eq.s32.totalorder %v1136, %v902
    %vm1155 = vcmp.eq.s32.totalorder %v1136, %v903
    %vm1156 = vcmp.eq.s32.totalorder %v1137, %v896
    %vm1157 = vcmp.eq.s32.totalorder %v1137, %v897
    %vm1158 = vcmp.eq.s32.totalorder %v1137, %v902
    %vm1159 = vcmp.eq.s32.totalorder %v1137, %v903
    %vm1160 = vcmp.eq.s32.totalorder %v1138, %v896
    %vm1161 = vcmp.eq.s32.totalorder %v1138, %v897
    %vm1162 = vcmp.eq.s32.totalorder %v1138, %v902
    %vm1163 = vcmp.eq.s32.totalorder %v1138, %v903
    %vm1164 = vcmp.eq.s32.totalorder %v1139, %v896
    %vm1165 = vcmp.eq.s32.totalorder %v1139, %v897
    %vm1166 = vcmp.eq.s32.totalorder %v1139, %v902
    %vm1167 = vcmp.eq.s32.totalorder %v1139, %v903
    %vm1168 = vcmp.eq.s32.totalorder %v1140, %v896
    %vm1169 = vcmp.eq.s32.totalorder %v1140, %v897
    %vm1170 = vcmp.eq.s32.totalorder %v1140, %v902
    %vm1171 = vcmp.eq.s32.totalorder %v1140, %v903
    %vm1172 = vcmp.eq.s32.totalorder %v1141, %v896
    %vm1173 = vcmp.eq.s32.totalorder %v1141, %v897
    %vm1174 = vcmp.eq.s32.totalorder %v1141, %v902
    %vm1175 = vcmp.eq.s32.totalorder %v1141, %v903
    %vm1176 = vcmp.eq.s32.totalorder %v1142, %v896
    %vm1177 = vcmp.eq.s32.totalorder %v1142, %v897
    %vm1178 = vcmp.eq.s32.totalorder %v1142, %v902
    %vm1179 = vcmp.eq.s32.totalorder %v1142, %v903
    %vm1180 = vcmp.eq.s32.totalorder %v1143, %v896
    %vm1181 = vcmp.eq.s32.totalorder %v1143, %v897
    %vm1182 = vcmp.eq.s32.totalorder %v1143, %v902
    %vm1183 = vcmp.eq.s32.totalorder %v1143, %v903
    %vm1184 = vcmp.eq.s32.totalorder %v1144, %v896
    %vm1185 = vcmp.eq.s32.totalorder %v1144, %v897
    %vm1186 = vcmp.eq.s32.totalorder %v1144, %v902
    %vm1187 = vcmp.eq.s32.totalorder %v1144, %v903
    %vm1188 = vcmp.eq.s32.totalorder %v1145, %v896
    %vm1189 = vcmp.eq.s32.totalorder %v1145, %v897
    %vm1190 = vcmp.eq.s32.totalorder %v1145, %v902
    %vm1191 = vcmp.eq.s32.totalorder %v1145, %v903
    %vm1192 = vcmp.eq.s32.totalorder %v1146, %v896
    %vm1193 = vcmp.eq.s32.totalorder %v1146, %v897
    %vm1194 = vcmp.eq.s32.totalorder %v1146, %v902
    %vm1195 = vcmp.eq.s32.totalorder %v1146, %v903
    %vm1196 = vcmp.eq.s32.totalorder %v1147, %v896
    %vm1197 = vcmp.eq.s32.totalorder %v1147, %v897
    %vm1198 = vcmp.eq.s32.totalorder %v1147, %v902
    %vm1199 = vcmp.eq.s32.totalorder %v1147, %v903
    %vm1200 = vcmp.eq.s32.totalorder %v1148, %v896
    %vm1201 = vcmp.eq.s32.totalorder %v1148, %v897
    %vm1202 = vcmp.eq.s32.totalorder %v1148, %v902
    %vm1203 = vcmp.eq.s32.totalorder %v1148, %v903
    %vm1204 = vcmp.eq.s32.totalorder %v1149, %v896
    %vm1205 = vcmp.eq.s32.totalorder %v1149, %v897
    %vm1206 = vcmp.eq.s32.totalorder %v1149, %v902
    %vm1207 = vcmp.eq.s32.totalorder %v1149, %v903
    %vm1208 = vcmp.eq.s32.totalorder %v1150, %v896
    %vm1209 = vcmp.eq.s32.totalorder %v1150, %v897
    %vm1210 = vcmp.eq.s32.totalorder %v1150, %v902
    %vm1211 = vcmp.eq.s32.totalorder %v1150, %v903
    %vm1212 = vcmp.eq.s32.totalorder %v1151, %v896
    %vm1213 = vcmp.eq.s32.totalorder %v1151, %v897
    %vm1214 = vcmp.eq.s32.totalorder %v1151, %v902
    %vm1215 = vcmp.eq.s32.totalorder %v1151, %v903
    %v1216 = vsel %vm1152, %v631, 0.0
    %v1217 = vsel %vm1153, %v631, 0.0
    %v1218 = vsel %vm1154, %v631, 0.0
    %v1219 = vsel %vm1155, %v631, 0.0
    %v1220 = vsel %vm1156, %v632, 0.0
    %v1221 = vsel %vm1157, %v632, 0.0
    %v1222 = vsel %vm1158, %v632, 0.0
    %v1223 = vsel %vm1159, %v632, 0.0
    %v1224 = vsel %vm1160, %v633, 0.0
    %v1225 = vsel %vm1161, %v633, 0.0
    %v1226 = vsel %vm1162, %v633, 0.0
    %v1227 = vsel %vm1163, %v633, 0.0
    %v1228 = vsel %vm1164, %v634, 0.0
    %v1229 = vsel %vm1165, %v634, 0.0
    %v1230 = vsel %vm1166, %v634, 0.0
    %v1231 = vsel %vm1167, %v634, 0.0
    %v1232 = vsel %vm1168, %v635, 0.0
    %v1233 = vsel %vm1169, %v635, 0.0
    %v1234 = vsel %vm1170, %v635, 0.0
    %v1235 = vsel %vm1171, %v635, 0.0
    %v1236 = vsel %vm1172, %v636, 0.0
    %v1237 = vsel %vm1173, %v636, 0.0
    %v1238 = vsel %vm1174, %v636, 0.0
    %v1239 = vsel %vm1175, %v636, 0.0
    %v1240 = vsel %vm1176, %v637, 0.0
    %v1241 = vsel %vm1177, %v637, 0.0
    %v1242 = vsel %vm1178, %v637, 0.0
    %v1243 = vsel %vm1179, %v637, 0.0
    %v1244 = vsel %vm1180, %v638, 0.0
    %v1245 = vsel %vm1181, %v638, 0.0
    %v1246 = vsel %vm1182, %v638, 0.0
    %v1247 = vsel %vm1183, %v638, 0.0
    %v1248 = vsel %vm1184, %v639, 0.0
    %v1249 = vsel %vm1185, %v639, 0.0
    %v1250 = vsel %vm1186, %v639, 0.0
    %v1251 = vsel %vm1187, %v639, 0.0
    %v1252 = vsel %vm1188, %v640, 0.0
    %v1253 = vsel %vm1189, %v640, 0.0
    %v1254 = vsel %vm1190, %v640, 0.0
    %v1255 = vsel %vm1191, %v640, 0.0
    %v1256 = vsel %vm1192, %v641, 0.0
    %v1257 = vsel %vm1193, %v641, 0.0
    %v1258 = vsel %vm1194, %v641, 0.0
    %v1259 = vsel %vm1195, %v641, 0.0
    %v1260 = vsel %vm1196, %v642, 0.0
    %v1261 = vsel %vm1197, %v642, 0.0
    %v1262 = vsel %vm1198, %v642, 0.0
    %v1263 = vsel %vm1199, %v642, 0.0
    %v1264 = vsel %vm1200, %v643, 0.0
    %v1265 = vsel %vm1201, %v643, 0.0
    %v1266 = vsel %vm1202, %v643, 0.0
    %v1267 = vsel %vm1203, %v643, 0.0
    %v1268 = vsel %vm1204, %v644, 0.0
    %v1269 = vsel %vm1205, %v644, 0.0
    %v1270 = vsel %vm1206, %v644, 0.0
    %v1271 = vsel %vm1207, %v644, 0.0
    %v1272 = vsel %vm1208, %v645, 0.0
    %v1273 = vsel %vm1209, %v645, 0.0
    %v1274 = vsel %vm1210, %v645, 0.0
    %v1275 = vsel %vm1211, %v645, 0.0
    %v1276 = vsel %vm1212, %v646, 0.0
    %v1277 = vsel %vm1213, %v646, 0.0
    %v1278 = vsel %vm1214, %v646, 0.0
    %v1279 = vsel %vm1215, %v646, 0.0
    %v1280 = vadd.f32 %v1216, %v1220
    %v1281 = vadd.f32 %v1280, %v1224
    %v1282 = vadd.f32 %v1281, %v1228
    %v1283 = vadd.f32 %v1282, %v1232
    %v1284 = vadd.f32 %v1283, %v1236
    %v1285 = vadd.f32 %v1284, %v1240
    %v1286 = vadd.f32 %v1285, %v1244
    %v1287 = vadd.f32 %v1286, %v1248
    %v1288 = vadd.f32 %v1287, %v1252
    %v1289 = vadd.f32 %v1288, %v1256
    %v1290 = vadd.f32 %v1289, %v1260
    %v1291 = vadd.f32 %v1290, %v1264
    %v1292 = vadd.f32 %v1291, %v1268
    %v1293 = vadd.f32 %v1292, %v1272
    %v1294 = vadd.f32 %v1293, %v1276
    %v1295 = vadd.f32 %v1217, %v1221
    %v1296 = vadd.f32 %v1295, %v1225
    %v1297 = vadd.f32 %v1296, %v1229
    %v1298 = vadd.f32 %v1297, %v1233
    %v1299 = vadd.f32 %v1298, %v1237
    %v1300 = vadd.f32 %v1299, %v1241
    %v1301 = vadd.f32 %v1300, %v1245
    %v1302 = vadd.f32 %v1301, %v1249
    %v1303 = vadd.f32 %v1302, %v1253
    %v1304 = vadd.f32 %v1303, %v1257
    %v1305 = vadd.f32 %v1304, %v1261
    %v1306 = vadd.f32 %v1305, %v1265
    %v1307 = vadd.f32 %v1306, %v1269
    %v1308 = vadd.f32 %v1307, %v1273
    %v1309 = vadd.f32 %v1308, %v1277
    %v1310 = vadd.f32 %v1218, %v1222
    %v1311 = vadd.f32 %v1310, %v1226
    %v1312 = vadd.f32 %v1311, %v1230
    %v1313 = vadd.f32 %v1312, %v1234
    %v1314 = vadd.f32 %v1313, %v1238
    %v1315 = vadd.f32 %v1314, %v1242
    %v1316 = vadd.f32 %v1315, %v1246
    %v1317 = vadd.f32 %v1316, %v1250
    %v1318 = vadd.f32 %v1317, %v1254
    %v1319 = vadd.f32 %v1318, %v1258
    %v1320 = vadd.f32 %v1319, %v1262
    %v1321 = vadd.f32 %v1320, %v1266
    %v1322 = vadd.f32 %v1321, %v1270
    %v1323 = vadd.f32 %v1322, %v1274
    %v1324 = vadd.f32 %v1323, %v1278
    %v1325 = vadd.f32 %v1219, %v1223
    %v1326 = vadd.f32 %v1325, %v1227
    %v1327 = vadd.f32 %v1326, %v1231
    %v1328 = vadd.f32 %v1327, %v1235
    %v1329 = vadd.f32 %v1328, %v1239
    %v1330 = vadd.f32 %v1329, %v1243
    %v1331 = vadd.f32 %v1330, %v1247
    %v1332 = vadd.f32 %v1331, %v1251
    %v1333 = vadd.f32 %v1332, %v1255
    %v1334 = vadd.f32 %v1333, %v1259
    %v1335 = vadd.f32 %v1334, %v1263
    %v1336 = vadd.f32 %v1335, %v1267
    %v1337 = vadd.f32 %v1336, %v1271
    %v1338 = vadd.f32 %v1337, %v1275
    %v1339 = vadd.f32 %v1338, %v1279
    %v1340 = vadd.f32 %v1076, %v1294
    %v1341 = vadd.f32 %v1091, %v1309
    %v1342 = vadd.f32 %v1106, %v1324
    %v1343 = vadd.f32 %v1121, %v1339
    %1344 = vst [vmem:[#allocation8] sm:$0xff] %v1340
    %1345 = vst [vmem:[#allocation8 + $0x8] sm:$0xff] %v1341
    %1346 = vst [vmem:[#allocation8 + $0x10] sm:$0xff] %v1342
    %1347 = vst [vmem:[#allocation8 + $0x18] sm:$0xff] %v1343
    // Predicated region
    $region26: #{_importance_sample_and_sort.1} parent=1 // pred_check
      _
    $region27: #{_importance_sample_and_sort.1} parent=1 // pred_check_branch
      %1349 = sbr.rel (0) target = $region29
    $region28: #{_importance_sample_and_sort.1} parent=1 // pred_region
      %1351 = vsyncadd [#allocation4], 0
      %s1352 = sshll.u32 [#allocation8], 4
      %s1353 = int_to_ptr.vmem [resolvable:$true] %s1352
      %s1354 = sshll.u32 %s3, 4
      %s1355 = int_to_ptr.hbm [resolvable:$true] %s1354
      %1360 = dma.vmem_to_hbm [thread:$0]  %s1353, 512, %s1355, [#allocation4], 128, 128, 8
    $region29: #{_importance_sample_and_sort.1} parent=1 // pred_fallthru
      _
    // Predicated region
    $region30: #{_importance_sample_and_sort.1} parent=1 // pred_check
      _
    $region31: #{_importance_sample_and_sort.1} parent=1 // pred_check_branch
      %1362 = sbr.rel (0) target = $region33
    $region32: #{_importance_sample_and_sort.1} parent=1 // pred_region
      %1364 = dma.done [#allocation4], 512
    $region33: #{_importance_sample_and_sort.1} parent=1 // pred_fallthru
      _
    %1365 = vsyncpa [#allocation3], 1
    %1366 = vsyncpa [#allocation6], 1
    %1367 = vsyncpa [#allocation4], 1

</llo_original>
